<compile_context>
chip_gen: v6e
topology: v6e:2x2x1
jax: 0.10.0
libtpu: 0.0.40
codegen_flags: <defaults>
</compile_context>

<pallas_src>
from functools import partial

import jax
import jax.numpy as jnp
from jax import lax
from jax.experimental import pallas as pl
from jax.experimental.pallas import tpu as pltpu

EPS = 1e-5  # PyTorch BatchNorm1d default eps


def _round_up(x, m):
    return (x + m - 1) // m * m


def _stack_weight(w):
    """(3, C_out, C_in) -> (C_out, 3*C_in); column blocks ordered [k=0, k=1, k=2]."""
    k, co, ci = w.shape
    return jnp.transpose(w, (1, 0, 2)).reshape(co, k * ci)


def _conv_taps(h, dil):
    """Stack the three dilated taps along the channel (sublane) axis.

    h: (C, B) lane-flattened activations whose per-sample zero pad is >= dil wide, so
    the circular rolls read zeros whenever a tap crosses a sample/pad boundary.
    Returns (3C, B): row block k holds h[:, g + (k-1)*dil].
    """
    b = h.shape[-1]
    left = pltpu.roll(h, dil % b, axis=1)       # reads h[:, g - dil]
    right = pltpu.roll(h, (-dil) % b, axis=1)   # reads h[:, g + dil]
    return jnp.concatenate([left, h, right], axis=0)


def _bn_affine(s, q, count, gamma, beta):
    """Fold training-mode BN into a per-channel scale/shift (all (C,1) f32).

    # TODO(synk): single-pass E[x^2]-E[x]^2 variance can lose digits for large means;
    # use a compensated / two-pass form if this block is trained at scale.
    """
    inv = 1.0 / count
    mean = s * inv
    var = jnp.maximum(q * inv - mean * mean, 0.0)   # biased variance
    scale = gamma * lax.rsqrt(var + EPS)
    shift = beta - mean * scale
    return scale, shift


def _accumulate_stats(y, s_ref, q_ref):
    """Per-channel sum / sum-of-squares accumulated across the batch-block grid axis."""
    @pl.when(pl.program_id(0) == 0)
    def _():
        s_ref[...] = jnp.zeros_like(s_ref)
        q_ref[...] = jnp.zeros_like(q_ref)

    s_ref[...] += jnp.sum(y, axis=1, keepdims=True)
    q_ref[...] += jnp.sum(y * y, axis=1, keepdims=True)


def _conv_stats_kernel(x_ref, w_ref, m_ref, y_ref, s_ref, q_ref, *, dil):
    """conv1 (stacked-tap single matmul, f32 accumulation) + BN1 partial stats."""
    x = x_ref[...].astype(w_ref.dtype)               # cast BEFORE building the taps
    taps = _conv_taps(x, dil)                        # (3C, B)
    y = jnp.dot(w_ref[...], taps, preferred_element_type=jnp.float32)   # (C, B) f32
    y = y * m_ref[...]                               # zero pad lanes (stats + next taps)
    y_ref[...] = y.astype(y_ref.dtype)
    _accumulate_stats(y, s_ref, q_ref)


def _bn_relu_conv_stats_kernel(y1_ref, s1_ref, q1_ref, g1_ref, b1_ref, w_ref, m_ref,
                               y2_ref, s_ref, q_ref, *, dil, count):
    """BN1 affine (fused in-kernel) + ReLU + conv2 + BN2 partial stats."""
    scale, shift = _bn_affine(s1_ref[...], q1_ref[...], count, g1_ref[...], b1_ref[...])
    m = m_ref[...]
    h = y1_ref[...].astype(jnp.float32) * scale + shift
    h = jnp.maximum(h, 0.0) * m                      # ReLU; re-zero pad lanes
    taps = _conv_taps(h.astype(w_ref.dtype), dil)
    y = jnp.dot(w_ref[...], taps, preferred_element_type=jnp.float32)
    y = y * m
    y2_ref[...] = y.astype(y2_ref.dtype)
    _accumulate_stats(y, s_ref, q_ref)


def _bn_res_relu_kernel(y2_ref, s2_ref, q2_ref, g2_ref, b2_ref, x_ref, o_ref, *, count):
    """BN2 affine (fused in-kernel) + residual add + final ReLU."""
    scale, shift = _bn_affine(s2_ref[...], q2_ref[...], count, g2_ref[...], b2_ref[...])
    out = y2_ref[...].astype(jnp.float32) * scale + shift + x_ref[...]
    o_ref[...] = jnp.maximum(out, 0.0).astype(o_ref.dtype)


def _step_bytes(c, lanes, act_bytes, mxu_bytes):
    """Conservative per-grid-step VMEM working-set estimate."""
    f32 = 4
    io = 2 * c * lanes * (f32 + act_bytes)       # double-buffered activation in/out blocks
    taps = 2 * 3 * c * lanes * mxu_bytes         # rolled copies + concatenated tap stack
    acc = c * lanes * f32                        # f32 matmul result
    return io + taps + acc + (2 << 20)


def _pick_batch_block(n, c, lp, act_bytes, mxu_bytes, budget=20 << 20):
    """Largest sample-aligned batch block whose working set fits the VMEM budget."""
    for bb in range(n, 0, -1):
        if n % bb == 0 and _step_bytes(c, bb * lp, act_bytes, mxu_bytes) <= budget:
            return bb
    # TODO(synk): for very long L (a single sample over budget) also tile the lane axis
    # with dil-wide halos so one step never exceeds VMEM (v7x physical VMEM is 64 MiB).
    return 1


@partial(jax.jit, static_argnames=("dil", "use_bf16_matmul", "batch_block"))
def res_block_dilated(x, params, *, dil, use_bf16_matmul=True, batch_block=None):
    """x: (N, C, L) float32 in PyTorch Conv1d NCL layout."""
    n, c, l = x.shape
    # Per-sample lane padding (pad >= dil) -> dilated taps are pure lane rolls and every
    # kernel tile is lane-dense (unmasked vector stores).
    lp = _round_up(l + dil, 128)
    xp = jnp.pad(x, ((0, 0), (0, 0), (0, lp - l)))
    # Lane-flatten the batch: (N, C, Lp) -> (C, N*Lp).  One relayout on the way in/out;
    # all three passes then run single wide 2D matmuls / elementwise tiles.
    xf = jnp.transpose(xp, (1, 0, 2)).reshape(c, n * lp)
    mask = (jnp.arange(n * lp, dtype=jnp.int32) % lp < l).astype(jnp.float32)[None, :]

    mxu_dtype = jnp.bfloat16 if use_bf16_matmul else jnp.float32
    act_dtype = jnp.bfloat16 if use_bf16_matmul else jnp.float32   # inter-pass HBM dtype
    w1 = _stack_weight(params["w1"]).astype(mxu_dtype)             # (C, 3C)
    w2 = _stack_weight(params["w2"]).astype(mxu_dtype)
    # NOTE: conv biases b1/b2 are intentionally unused -- training-mode BN subtracts the
    # per-channel batch mean, so a per-channel bias cancels exactly.

    act_bytes = jnp.dtype(act_dtype).itemsize
    mxu_bytes = jnp.dtype(mxu_dtype).itemsize
    if batch_block is None:
        bb = _pick_batch_block(n, c, lp, act_bytes, mxu_bytes)
    else:
        assert n % batch_block == 0
        bb = batch_block
    steps = n // bb
    bl = bb * lp
    vmem_limit = int(min(max(_step_bytes(c, bl, act_bytes, mxu_bytes) + (12 << 20),
                             16 << 20), 48 << 20))

    act_spec = pl.BlockSpec((c, bl), lambda i: (0, i))
    w_spec = pl.BlockSpec((c, 3 * c), lambda i: (0, 0))
    mask_spec = pl.BlockSpec((1, bl), lambda i: (0, i))
    chan_spec = pl.BlockSpec((c, 1), lambda i: (0, 0))
    stat_spec = pl.BlockSpec((c, 1), lambda i: (0, 0))
    act_shape = jax.ShapeDtypeStruct((c, n * lp), act_dtype)
    stat_shape = jax.ShapeDtypeStruct((c, 1), jnp.float32)

    reduce_params = pltpu.CompilerParams(
        dimension_semantics=("arbitrary",),   # batch-block axis carries the BN stats reduction
        vmem_limit_bytes=vmem_limit)
    count = float(n * l)

    # Pass 1: conv1 + per-channel sum / sumsq.
    y1, s1, q1 = pl.pallas_call(
        partial(_conv_stats_kernel, dil=dil),
        grid=(steps,),
        in_specs=[act_spec, w_spec, mask_spec],
        out_specs=[act_spec, stat_spec, stat_spec],
        out_shape=[act_shape, stat_shape, stat_shape],
        compiler_params=reduce_params,
    )(xf, w1, mask)

    # Pass 2: BN1 affine (in-kernel) + ReLU + conv2 + per-channel sum / sumsq.
    y2, s2, q2 = pl.pallas_call(
        partial(_bn_relu_conv_stats_kernel, dil=dil, count=count),
        grid=(steps,),
        in_specs=[act_spec, chan_spec, chan_spec, chan_spec, chan_spec, w_spec, mask_spec],
        out_specs=[act_spec, stat_spec, stat_spec],
        out_shape=[act_shape, stat_shape, stat_shape],
        compiler_params=reduce_params,
    )(y1, s1, q1, params["g1"], params["be1"], w2, mask)

    # Pass 3: BN2 affine (in-kernel) + residual + ReLU (pure elementwise, fully parallel).
    out_f = pl.pallas_call(
        partial(_bn_res_relu_kernel, count=count),
        grid=(steps,),
        in_specs=[act_spec, chan_spec, chan_spec, chan_spec, chan_spec, act_spec],
        out_specs=act_spec,
        out_shape=jax.ShapeDtypeStruct((c, n * lp), x.dtype),
        compiler_params=pltpu.CompilerParams(
            dimension_semantics=("parallel",),
            vmem_limit_bytes=vmem_limit),
    )(y2, s2, q2, params["g2"], params["be2"], xf)

    # TODO(synk): a stacked chain of ResBlocks should consume the padded (C, N*Lp)
    # layout directly and relayout/slice only once at the chain boundary.
    return jnp.transpose(out_f.reshape(c, n, lp), (1, 0, 2))[:, :, :l]


def reference(x, params, dil):
    """Pure-JAX reference mirroring the PyTorch forward (training-mode BN)."""
    def conv(inp, w, b):
        wt = jnp.transpose(w, (1, 2, 0))  # (3,O,I) -> (O,I,3)
        y = jax.lax.conv_general_dilated(
            inp, wt, window_strides=(1,), padding=[(dil, dil)],
            rhs_dilation=(dil,), dimension_numbers=("NCH", "OIH", "NCH"))
        return y + b.reshape(1, -1, 1)

    def bn(y, g, be):
        mean = jnp.mean(y, axis=(0, 2), keepdims=True)
        var = jnp.mean((y - mean) ** 2, axis=(0, 2), keepdims=True)
        return (y - mean) / jnp.sqrt(var + EPS) * g.reshape(1, -1, 1) + be.reshape(1, -1, 1)

    out = conv(x, params["w1"], params["b1"])
    out = bn(out, params["g1"], params["be1"])
    out = jnp.maximum(out, 0.0)
    out = conv(out, params["w2"], params["b2"])
    out = bn(out, params["g2"], params["be2"])
    return jnp.maximum(out + x, 0.0)


def make_params(key, hidden):
    ks = jax.random.split(key, 8)
    return {
        # conv weights stored as (k_tap, C_out, C_in); biases kept only for the
        # reference (they cancel exactly through training-mode BN).
        "w1": 0.2 * jax.random.normal(ks[0], (3, hidden, hidden), jnp.float32),
        "b1": 0.1 * jax.random.normal(ks[1], (hidden, 1), jnp.float32),
        "g1": 1.0 + 0.1 * jax.random.normal(ks[2], (hidden, 1), jnp.float32),
        "be1": 0.1 * jax.random.normal(ks[3], (hidden, 1), jnp.float32),
        "w2": 0.2 * jax.random.normal(ks[4], (3, hidden, hidden), jnp.float32),
        "b2": 0.1 * jax.random.normal(ks[5], (hidden, 1), jnp.float32),
        "g2": 1.0 + 0.1 * jax.random.normal(ks[6], (hidden, 1), jnp.float32),
        "be2": 0.1 * jax.random.normal(ks[7], (hidden, 1), jnp.float32),
    }


if __name__ == "__main__":
    key = jax.random.PRNGKey(0)
    configs = [
        # (batch, hidden, length, dil)
        (3, 32, 24, 2),
        (2, 32, 40, 5),
        (2, 32, 130, 3),
    ]
    for batch, hidden, length, dil in configs:
        key, kx, kp = jax.random.split(key, 3)
        x = jax.random.normal(kx, (batch, hidden, length), jnp.float32)
        params = make_params(kp, hidden)
        ref = reference(x, params, dil)

        # Exact path (f32 MXU + f32 intermediates): tight check against the f32 reference.
        out = jax.block_until_ready(
            res_block_dilated(x, params, dil=dil, use_bf16_matmul=False))
        assert out.shape == ref.shape
        err = float(jnp.max(jnp.abs(out - ref)))
        assert jnp.allclose(out, ref, atol=5e-4, rtol=5e-4), (dil, err)

        # Fast path (bf16 MXU operands + bf16 inter-pass activations, f32 accumulation).
        out_bf16 = jax.block_until_ready(
            res_block_dilated(x, params, dil=dil, use_bf16_matmul=True))
        err_bf16 = float(jnp.max(jnp.abs(out_bf16 - ref)))
        assert jnp.allclose(out_bf16, ref, atol=1.5e-1, rtol=1.5e-1), (dil, err_bf16)

    # Multi-step path: force batch_block=1 so the stats accumulate across several
    # "arbitrary" grid steps (exercises the pl.when init + VMEM-resident accumulator).
    batch, hidden, length, dil = configs[0]
    key, kx, kp = jax.random.split(key, 3)
    x = jax.random.normal(kx, (batch, hidden, length), jnp.float32)
    params = make_params(kp, hidden)
    ref = reference(x, params, dil)
    out = jax.block_until_ready(
        res_block_dilated(x, params, dil=dil, use_bf16_matmul=False, batch_block=1))
    err = float(jnp.max(jnp.abs(out - ref)))
    assert jnp.allclose(out, ref, atol=5e-4, rtol=5e-4), ("multi-step", err)

    print("KERNEL_OK")
</pallas_src>

<mosaic_0001>
module attributes {stable_mosaic.version = 11 : i64} {
  func.func @_bn_relu_conv_stats_kernel(%arg0: i32, %arg1: memref<32x384xf32, #tpu.memory_space<vmem>>, %arg2: memref<32x1xf32, #tpu.memory_space<vmem>>, %arg3: memref<32x1xf32, #tpu.memory_space<vmem>>, %arg4: memref<32x1xf32, #tpu.memory_space<vmem>>, %arg5: memref<32x1xf32, #tpu.memory_space<vmem>>, %arg6: memref<32x96xf32, #tpu.memory_space<vmem>>, %arg7: memref<1x384xf32, #tpu.memory_space<vmem>>, %arg8: memref<32x384xf32, #tpu.memory_space<vmem>>, %arg9: memref<32x1xf32, #tpu.memory_space<vmem>>, %arg10: memref<32x1xf32, #tpu.memory_space<vmem>>) attributes {dimension_semantics = [#tpu.dimension_semantics<arbitrary>], iteration_bounds = array<i64: 1>, scalar_prefetch = 0 : i64, scratch_operands = 0 : i64, tpu.core_type = #tpu.core_type<tc>, window_params = [{transform_indices = @transform_0, window_bounds = array<i64: 32, 384>}, {pipeline_mode = #tpu.pipeline_mode<synchronous>, transform_indices = @transform_1, window_bounds = array<i64: 32, 1>}, {pipeline_mode = #tpu.pipeline_mode<synchronous>, transform_indices = @transform_2, window_bounds = array<i64: 32, 1>}, {pipeline_mode = #tpu.pipeline_mode<synchronous>, transform_indices = @transform_3, window_bounds = array<i64: 32, 1>}, {pipeline_mode = #tpu.pipeline_mode<synchronous>, transform_indices = @transform_4, window_bounds = array<i64: 32, 1>}, {pipeline_mode = #tpu.pipeline_mode<synchronous>, transform_indices = @transform_5, window_bounds = array<i64: 32, 96>}, {transform_indices = @transform_6, window_bounds = array<i64: 1, 384>}, {transform_indices = @transform_7, window_bounds = array<i64: 32, 384>}, {pipeline_mode = #tpu.pipeline_mode<synchronous>, transform_indices = @transform_8, window_bounds = array<i64: 32, 1>}, {pipeline_mode = #tpu.pipeline_mode<synchronous>, transform_indices = @transform_9, window_bounds = array<i64: 32, 1>}]} {
    %c0 = arith.constant 0 : index
    %c0_0 = arith.constant 0 : index
    %0 = vector.load %arg2[%c0, %c0_0] : memref<32x1xf32, #tpu.memory_space<vmem>>, vector<32x1xf32>
    %c0_1 = arith.constant 0 : index
    %c0_2 = arith.constant 0 : index
    %1 = vector.load %arg3[%c0_1, %c0_2] : memref<32x1xf32, #tpu.memory_space<vmem>>, vector<32x1xf32>
    %c0_3 = arith.constant 0 : index
    %c0_4 = arith.constant 0 : index
    %2 = vector.load %arg4[%c0_3, %c0_4] : memref<32x1xf32, #tpu.memory_space<vmem>>, vector<32x1xf32>
    %c0_5 = arith.constant 0 : index
    %c0_6 = arith.constant 0 : index
    %3 = vector.load %arg5[%c0_5, %c0_6] : memref<32x1xf32, #tpu.memory_space<vmem>>, vector<32x1xf32>
    %cst = arith.constant 0.013888889 : f32
    %4 = vector.broadcast %cst : f32 to vector<32x1xf32>
    %5 = arith.mulf %0, %4 : vector<32x1xf32>
    %cst_7 = arith.constant 0.013888889 : f32
    %6 = vector.broadcast %cst_7 : f32 to vector<32x1xf32>
    %7 = arith.mulf %1, %6 : vector<32x1xf32>
    %8 = arith.mulf %5, %5 : vector<32x1xf32>
    %9 = arith.subf %7, %8 : vector<32x1xf32>
    %cst_8 = arith.constant 0.000000e+00 : f32
    %10 = vector.broadcast %cst_8 : f32 to vector<32x1xf32>
    %11 = arith.maximumf %9, %10 : vector<32x1xf32>
    %cst_9 = arith.constant 9.99999974E-6 : f32
    %12 = vector.broadcast %cst_9 : f32 to vector<32x1xf32>
    %13 = arith.addf %11, %12 : vector<32x1xf32>
    %14 = math.rsqrt %13 : vector<32x1xf32>
    %15 = arith.mulf %2, %14 : vector<32x1xf32>
    %16 = arith.mulf %5, %15 : vector<32x1xf32>
    %17 = arith.subf %3, %16 : vector<32x1xf32>
    %c0_10 = arith.constant 0 : index
    %c0_11 = arith.constant 0 : index
    %18 = vector.load %arg7[%c0_10, %c0_11] : memref<1x384xf32, #tpu.memory_space<vmem>>, vector<1x384xf32>
    %c0_12 = arith.constant 0 : index
    %c0_13 = arith.constant 0 : index
    %19 = vector.load %arg1[%c0_12, %c0_13] : memref<32x384xf32, #tpu.memory_space<vmem>>, vector<32x384xf32>
    %20 = vector.broadcast %15 : vector<32x1xf32> to vector<32x384xf32>
    %21 = arith.mulf %19, %20 : vector<32x384xf32>
    %22 = vector.broadcast %17 : vector<32x1xf32> to vector<32x384xf32>
    %23 = arith.addf %21, %22 : vector<32x384xf32>
    %cst_14 = arith.constant 0.000000e+00 : f32
    %24 = vector.broadcast %cst_14 : f32 to vector<32x384xf32>
    %25 = arith.maximumf %23, %24 : vector<32x384xf32>
    %26 = vector.broadcast %18 : vector<1x384xf32> to vector<32x384xf32>
    %27 = arith.mulf %25, %26 : vector<32x384xf32>
    %c2_i32 = arith.constant 2 : i32
    %28 = tpu.dynamic_rotate %27 by %c2_i32 dim 1 : vector<32x384xf32>, i32 -> vector<32x384xf32>
    %c382_i32 = arith.constant 382 : i32
    %29 = tpu.dynamic_rotate %27 by %c382_i32 dim 1 : vector<32x384xf32>, i32 -> vector<32x384xf32>
    %30 = tpu.concatenate %28, %27, %29 in 0 : vector<32x384xf32>, vector<32x384xf32>, vector<32x384xf32> -> vector<96x384xf32>
    %c0_15 = arith.constant 0 : index
    %c0_16 = arith.constant 0 : index
    %31 = vector.load %arg6[%c0_15, %c0_16] : memref<32x96xf32, #tpu.memory_space<vmem>>, vector<32x96xf32>
    %cst_17 = arith.constant dense<0.000000e+00> : vector<32x384xf32>
    %32 = tpu.matmul %31, %30, %cst_17 {dimension_numbers = #tpu.dot_dimension_numbers<[1], [0], [0], [1], [0, 0, 1, 1], [], []>} : vector<32x96xf32>, vector<96x384xf32>, vector<32x384xf32> -> vector<32x384xf32>
    %33 = vector.broadcast %18 : vector<1x384xf32> to vector<32x384xf32>
    %34 = arith.mulf %32, %33 : vector<32x384xf32>
    %c0_18 = arith.constant 0 : index
    %c0_19 = arith.constant 0 : index
    %35 = vector.load %arg8[%c0_18, %c0_19] : memref<32x384xf32, #tpu.memory_space<vmem>>, vector<32x384xf32>
    tpu.vector_store %arg8[%c0_18, %c0_19], %34 {strides = array<i32>} : memref<32x384xf32, #tpu.memory_space<vmem>>, vector<32x384xf32>,
    %c0_i32 = arith.constant 0 : i32
    %36 = arith.cmpi eq, %arg0, %c0_i32 : i32
    %37 = arith.extui %36 : i1 to i32
    %c0_i32_20 = arith.constant 0 : i32
    %38 = arith.cmpi ne, %37, %c0_i32_20 : i32
    scf.if %38 {
      %cst_31 = arith.constant 0.000000e+00 : f32
      %50 = vector.broadcast %cst_31 : f32 to vector<32x1xf32>
      %c0_32 = arith.constant 0 : index
      %c0_33 = arith.constant 0 : index
      %51 = vector.load %arg9[%c0_32, %c0_33] : memref<32x1xf32, #tpu.memory_space<vmem>>, vector<32x1xf32>
      tpu.vector_store %arg9[%c0_32, %c0_33], %50 {strides = array<i32>} : memref<32x1xf32, #tpu.memory_space<vmem>>, vector<32x1xf32>,
      %cst_34 = arith.constant 0.000000e+00 : f32
      %52 = vector.broadcast %cst_34 : f32 to vector<32x1xf32>
      %c0_35 = arith.constant 0 : index
      %c0_36 = arith.constant 0 : index
      %53 = vector.load %arg10[%c0_35, %c0_36] : memref<32x1xf32, #tpu.memory_space<vmem>>, vector<32x1xf32>
      tpu.vector_store %arg10[%c0_35, %c0_36], %52 {strides = array<i32>} : memref<32x1xf32, #tpu.memory_space<vmem>>, vector<32x1xf32>,
    } else {
    }
    %c0_21 = arith.constant 0 : index
    %c0_22 = arith.constant 0 : index
    %39 = vector.load %arg9[%c0_21, %c0_22] : memref<32x1xf32, #tpu.memory_space<vmem>>, vector<32x1xf32>
    %cst_23 = arith.constant dense<0.000000e+00> : vector<32xf32>
    %40 = vector.multi_reduction <add>, %34, %cst_23 [1] : vector<32x384xf32> to vector<32xf32>
    %41 = vector.shape_cast %40 : vector<32xf32> to vector<32x1xf32>
    %42 = arith.addf %39, %41 : vector<32x1xf32>
    %c0_24 = arith.constant 0 : index
    %c0_25 = arith.constant 0 : index
    %43 = vector.load %arg9[%c0_24, %c0_25] : memref<32x1xf32, #tpu.memory_space<vmem>>, vector<32x1xf32>
    tpu.vector_store %arg9[%c0_24, %c0_25], %42 {strides = array<i32>} : memref<32x1xf32, #tpu.memory_space<vmem>>, vector<32x1xf32>,
    %c0_26 = arith.constant 0 : index
    %c0_27 = arith.constant 0 : index
    %44 = vector.load %arg10[%c0_26, %c0_27] : memref<32x1xf32, #tpu.memory_space<vmem>>, vector<32x1xf32>
    %45 = arith.mulf %34, %34 : vector<32x384xf32>
    %cst_28 = arith.constant dense<0.000000e+00> : vector<32xf32>
    %46 = vector.multi_reduction <add>, %45, %cst_28 [1] : vector<32x384xf32> to vector<32xf32>
    %47 = vector.shape_cast %46 : vector<32xf32> to vector<32x1xf32>
    %48 = arith.addf %44, %47 : vector<32x1xf32>
    %c0_29 = arith.constant 0 : index
    %c0_30 = arith.constant 0 : index
    %49 = vector.load %arg10[%c0_29, %c0_30] : memref<32x1xf32, #tpu.memory_space<vmem>>, vector<32x1xf32>
    tpu.vector_store %arg10[%c0_29, %c0_30], %48 {strides = array<i32>} : memref<32x1xf32, #tpu.memory_space<vmem>>, vector<32x1xf32>,
    return
  }
  func.func @transform_0(%arg0: i32) -> (i32, i32) {
    %c0_i32 = arith.constant 0 : i32
    %c0_i32_0 = arith.constant 0 : i32
    return %c0_i32, %arg0 : i32, i32
  }
  func.func @transform_1(%arg0: i32) -> (i32, i32) {
    %c0_i32 = arith.constant 0 : i32
    %c0_i32_0 = arith.constant 0 : i32
    %c0_i32_1 = arith.constant 0 : i32
    return %c0_i32, %c0_i32_0 : i32, i32
  }
  func.func @transform_2(%arg0: i32) -> (i32, i32) {
    %c0_i32 = arith.constant 0 : i32
    %c0_i32_0 = arith.constant 0 : i32
    %c0_i32_1 = arith.constant 0 : i32
    return %c0_i32, %c0_i32_0 : i32, i32
  }
  func.func @transform_3(%arg0: i32) -> (i32, i32) {
    %c0_i32 = arith.constant 0 : i32
    %c0_i32_0 = arith.constant 0 : i32
    %c0_i32_1 = arith.constant 0 : i32
    return %c0_i32, %c0_i32_0 : i32, i32
  }
  func.func @transform_4(%arg0: i32) -> (i32, i32) {
    %c0_i32 = arith.constant 0 : i32
    %c0_i32_0 = arith.constant 0 : i32
    %c0_i32_1 = arith.constant 0 : i32
    return %c0_i32, %c0_i32_0 : i32, i32
  }
  func.func @transform_5(%arg0: i32) -> (i32, i32) {
    %c0_i32 = arith.constant 0 : i32
    %c0_i32_0 = arith.constant 0 : i32
    %c0_i32_1 = arith.constant 0 : i32
    return %c0_i32, %c0_i32_0 : i32, i32
  }
  func.func @transform_6(%arg0: i32) -> (i32, i32) {
    %c0_i32 = arith.constant 0 : i32
    %c0_i32_0 = arith.constant 0 : i32
    return %c0_i32, %arg0 : i32, i32
  }
  func.func @transform_7(%arg0: i32) -> (i32, i32) {
    %c0_i32 = arith.constant 0 : i32
    %c0_i32_0 = arith.constant 0 : i32
    return %c0_i32, %arg0 : i32, i32
  }
  func.func @transform_8(%arg0: i32) -> (i32, i32) {
    %c0_i32 = arith.constant 0 : i32
    %c0_i32_0 = arith.constant 0 : i32
    %c0_i32_1 = arith.constant 0 : i32
    return %c0_i32, %c0_i32_0 : i32, i32
  }
  func.func @transform_9(%arg0: i32) -> (i32, i32) {
    %c0_i32 = arith.constant 0 : i32
    %c0_i32_0 = arith.constant 0 : i32
    %c0_i32_1 = arith.constant 0 : i32
    return %c0_i32, %c0_i32_0 : i32, i32
  }
}

module attributes {stable_mosaic.version = 11 : i64} {
  func.func @_conv_stats_kernel(%arg0: i32, %arg1: memref<32x384xf32, #tpu.memory_space<vmem>>, %arg2: memref<32x96xf32, #tpu.memory_space<vmem>>, %arg3: memref<1x384xf32, #tpu.memory_space<vmem>>, %arg4: memref<32x384xf32, #tpu.memory_space<vmem>>, %arg5: memref<32x1xf32, #tpu.memory_space<vmem>>, %arg6: memref<32x1xf32, #tpu.memory_space<vmem>>) attributes {dimension_semantics = [#tpu.dimension_semantics<arbitrary>], iteration_bounds = array<i64: 1>, scalar_prefetch = 0 : i64, scratch_operands = 0 : i64, tpu.core_type = #tpu.core_type<tc>, window_params = [{transform_indices = @transform_0, window_bounds = array<i64: 32, 384>}, {pipeline_mode = #tpu.pipeline_mode<synchronous>, transform_indices = @transform_1, window_bounds = array<i64: 32, 96>}, {transform_indices = @transform_2, window_bounds = array<i64: 1, 384>}, {transform_indices = @transform_3, window_bounds = array<i64: 32, 384>}, {pipeline_mode = #tpu.pipeline_mode<synchronous>, transform_indices = @transform_4, window_bounds = array<i64: 32, 1>}, {pipeline_mode = #tpu.pipeline_mode<synchronous>, transform_indices = @transform_5, window_bounds = array<i64: 32, 1>}]} {
    %c0 = arith.constant 0 : index
    %c0_0 = arith.constant 0 : index
    %0 = vector.load %arg1[%c0, %c0_0] : memref<32x384xf32, #tpu.memory_space<vmem>>, vector<32x384xf32>
    %c2_i32 = arith.constant 2 : i32
    %1 = tpu.dynamic_rotate %0 by %c2_i32 dim 1 : vector<32x384xf32>, i32 -> vector<32x384xf32>
    %c382_i32 = arith.constant 382 : i32
    %2 = tpu.dynamic_rotate %0 by %c382_i32 dim 1 : vector<32x384xf32>, i32 -> vector<32x384xf32>
    %3 = tpu.concatenate %1, %0, %2 in 0 : vector<32x384xf32>, vector<32x384xf32>, vector<32x384xf32> -> vector<96x384xf32>
    %c0_1 = arith.constant 0 : index
    %c0_2 = arith.constant 0 : index
    %4 = vector.load %arg2[%c0_1, %c0_2] : memref<32x96xf32, #tpu.memory_space<vmem>>, vector<32x96xf32>
    %cst = arith.constant dense<0.000000e+00> : vector<32x384xf32>
    %5 = tpu.matmul %4, %3, %cst {dimension_numbers = #tpu.dot_dimension_numbers<[1], [0], [0], [1], [0, 0, 1, 1], [], []>} : vector<32x96xf32>, vector<96x384xf32>, vector<32x384xf32> -> vector<32x384xf32>
    %c0_3 = arith.constant 0 : index
    %c0_4 = arith.constant 0 : index
    %6 = vector.load %arg3[%c0_3, %c0_4] : memref<1x384xf32, #tpu.memory_space<vmem>>, vector<1x384xf32>
    %7 = vector.broadcast %6 : vector<1x384xf32> to vector<32x384xf32>
    %8 = arith.mulf %5, %7 : vector<32x384xf32>
    %c0_5 = arith.constant 0 : index
    %c0_6 = arith.constant 0 : index
    %9 = vector.load %arg4[%c0_5, %c0_6] : memref<32x384xf32, #tpu.memory_space<vmem>>, vector<32x384xf32>
    tpu.vector_store %arg4[%c0_5, %c0_6], %8 {strides = array<i32>} : memref<32x384xf32, #tpu.memory_space<vmem>>, vector<32x384xf32>,
    %c0_i32 = arith.constant 0 : i32
    %10 = arith.cmpi eq, %arg0, %c0_i32 : i32
    %11 = arith.extui %10 : i1 to i32
    %c0_i32_7 = arith.constant 0 : i32
    %12 = arith.cmpi ne, %11, %c0_i32_7 : i32
    scf.if %12 {
      %cst_18 = arith.constant 0.000000e+00 : f32
      %24 = vector.broadcast %cst_18 : f32 to vector<32x1xf32>
      %c0_19 = arith.constant 0 : index
      %c0_20 = arith.constant 0 : index
      %25 = vector.load %arg5[%c0_19, %c0_20] : memref<32x1xf32, #tpu.memory_space<vmem>>, vector<32x1xf32>
      tpu.vector_store %arg5[%c0_19, %c0_20], %24 {strides = array<i32>} : memref<32x1xf32, #tpu.memory_space<vmem>>, vector<32x1xf32>,
      %cst_21 = arith.constant 0.000000e+00 : f32
      %26 = vector.broadcast %cst_21 : f32 to vector<32x1xf32>
      %c0_22 = arith.constant 0 : index
      %c0_23 = arith.constant 0 : index
      %27 = vector.load %arg6[%c0_22, %c0_23] : memref<32x1xf32, #tpu.memory_space<vmem>>, vector<32x1xf32>
      tpu.vector_store %arg6[%c0_22, %c0_23], %26 {strides = array<i32>} : memref<32x1xf32, #tpu.memory_space<vmem>>, vector<32x1xf32>,
    } else {
    }
    %c0_8 = arith.constant 0 : index
    %c0_9 = arith.constant 0 : index
    %13 = vector.load %arg5[%c0_8, %c0_9] : memref<32x1xf32, #tpu.memory_space<vmem>>, vector<32x1xf32>
    %cst_10 = arith.constant dense<0.000000e+00> : vector<32xf32>
    %14 = vector.multi_reduction <add>, %8, %cst_10 [1] : vector<32x384xf32> to vector<32xf32>
    %15 = vector.shape_cast %14 : vector<32xf32> to vector<32x1xf32>
    %16 = arith.addf %13, %15 : vector<32x1xf32>
    %c0_11 = arith.constant 0 : index
    %c0_12 = arith.constant 0 : index
    %17 = vector.load %arg5[%c0_11, %c0_12] : memref<32x1xf32, #tpu.memory_space<vmem>>, vector<32x1xf32>
    tpu.vector_store %arg5[%c0_11, %c0_12], %16 {strides = array<i32>} : memref<32x1xf32, #tpu.memory_space<vmem>>, vector<32x1xf32>,
    %c0_13 = arith.constant 0 : index
    %c0_14 = arith.constant 0 : index
    %18 = vector.load %arg6[%c0_13, %c0_14] : memref<32x1xf32, #tpu.memory_space<vmem>>, vector<32x1xf32>
    %19 = arith.mulf %8, %8 : vector<32x384xf32>
    %cst_15 = arith.constant dense<0.000000e+00> : vector<32xf32>
    %20 = vector.multi_reduction <add>, %19, %cst_15 [1] : vector<32x384xf32> to vector<32xf32>
    %21 = vector.shape_cast %20 : vector<32xf32> to vector<32x1xf32>
    %22 = arith.addf %18, %21 : vector<32x1xf32>
    %c0_16 = arith.constant 0 : index
    %c0_17 = arith.constant 0 : index
    %23 = vector.load %arg6[%c0_16, %c0_17] : memref<32x1xf32, #tpu.memory_space<vmem>>, vector<32x1xf32>
    tpu.vector_store %arg6[%c0_16, %c0_17], %22 {strides = array<i32>} : memref<32x1xf32, #tpu.memory_space<vmem>>, vector<32x1xf32>,
    return
  }
  func.func @transform_0(%arg0: i32) -> (i32, i32) {
    %c0_i32 = arith.constant 0 : i32
    %c0_i32_0 = arith.constant 0 : i32
    return %c0_i32, %arg0 : i32, i32
  }
  func.func @transform_1(%arg0: i32) -> (i32, i32) {
    %c0_i32 = arith.constant 0 : i32
    %c0_i32_0 = arith.constant 0 : i32
    %c0_i32_1 = arith.constant 0 : i32
    return %c0_i32, %c0_i32_0 : i32, i32
  }
  func.func @transform_2(%arg0: i32) -> (i32, i32) {
    %c0_i32 = arith.constant 0 : i32
    %c0_i32_0 = arith.constant 0 : i32
    return %c0_i32, %arg0 : i32, i32
  }
  func.func @transform_3(%arg0: i32) -> (i32, i32) {
    %c0_i32 = arith.constant 0 : i32
    %c0_i32_0 = arith.constant 0 : i32
    return %c0_i32, %arg0 : i32, i32
  }
  func.func @transform_4(%arg0: i32) -> (i32, i32) {
    %c0_i32 = arith.constant 0 : i32
    %c0_i32_0 = arith.constant 0 : i32
    %c0_i32_1 = arith.constant 0 : i32
    return %c0_i32, %c0_i32_0 : i32, i32
  }
  func.func @transform_5(%arg0: i32) -> (i32, i32) {
    %c0_i32 = arith.constant 0 : i32
    %c0_i32_0 = arith.constant 0 : i32
    %c0_i32_1 = arith.constant 0 : i32
    return %c0_i32, %c0_i32_0 : i32, i32
  }
}

module attributes {stable_mosaic.version = 11 : i64} {
  func.func @_bn_res_relu_kernel(%arg0: i32, %arg1: memref<32x384xf32, #tpu.memory_space<vmem>>, %arg2: memref<32x1xf32, #tpu.memory_space<vmem>>, %arg3: memref<32x1xf32, #tpu.memory_space<vmem>>, %arg4: memref<32x1xf32, #tpu.memory_space<vmem>>, %arg5: memref<32x1xf32, #tpu.memory_space<vmem>>, %arg6: memref<32x384xf32, #tpu.memory_space<vmem>>, %arg7: memref<32x384xf32, #tpu.memory_space<vmem>>) attributes {dimension_semantics = [#tpu.dimension_semantics<parallel>], iteration_bounds = array<i64: 1>, scalar_prefetch = 0 : i64, scratch_operands = 0 : i64, tpu.core_type = #tpu.core_type<tc>, window_params = [{transform_indices = @transform_0, window_bounds = array<i64: 32, 384>}, {pipeline_mode = #tpu.pipeline_mode<synchronous>, transform_indices = @transform_1, window_bounds = array<i64: 32, 1>}, {pipeline_mode = #tpu.pipeline_mode<synchronous>, transform_indices = @transform_2, window_bounds = array<i64: 32, 1>}, {pipeline_mode = #tpu.pipeline_mode<synchronous>, transform_indices = @transform_3, window_bounds = array<i64: 32, 1>}, {pipeline_mode = #tpu.pipeline_mode<synchronous>, transform_indices = @transform_4, window_bounds = array<i64: 32, 1>}, {transform_indices = @transform_5, window_bounds = array<i64: 32, 384>}, {transform_indices = @transform_6, window_bounds = array<i64: 32, 384>}]} {
    %c0 = arith.constant 0 : index
    %c0_0 = arith.constant 0 : index
    %0 = vector.load %arg2[%c0, %c0_0] : memref<32x1xf32, #tpu.memory_space<vmem>>, vector<32x1xf32>
    %c0_1 = arith.constant 0 : index
    %c0_2 = arith.constant 0 : index
    %1 = vector.load %arg3[%c0_1, %c0_2] : memref<32x1xf32, #tpu.memory_space<vmem>>, vector<32x1xf32>
    %c0_3 = arith.constant 0 : index
    %c0_4 = arith.constant 0 : index
    %2 = vector.load %arg4[%c0_3, %c0_4] : memref<32x1xf32, #tpu.memory_space<vmem>>, vector<32x1xf32>
    %c0_5 = arith.constant 0 : index
    %c0_6 = arith.constant 0 : index
    %3 = vector.load %arg5[%c0_5, %c0_6] : memref<32x1xf32, #tpu.memory_space<vmem>>, vector<32x1xf32>
    %cst = arith.constant 0.013888889 : f32
    %4 = vector.broadcast %cst : f32 to vector<32x1xf32>
    %5 = arith.mulf %0, %4 : vector<32x1xf32>
    %cst_7 = arith.constant 0.013888889 : f32
    %6 = vector.broadcast %cst_7 : f32 to vector<32x1xf32>
    %7 = arith.mulf %1, %6 : vector<32x1xf32>
    %8 = arith.mulf %5, %5 : vector<32x1xf32>
    %9 = arith.subf %7, %8 : vector<32x1xf32>
    %cst_8 = arith.constant 0.000000e+00 : f32
    %10 = vector.broadcast %cst_8 : f32 to vector<32x1xf32>
    %11 = arith.maximumf %9, %10 : vector<32x1xf32>
    %cst_9 = arith.constant 9.99999974E-6 : f32
    %12 = vector.broadcast %cst_9 : f32 to vector<32x1xf32>
    %13 = arith.addf %11, %12 : vector<32x1xf32>
    %14 = math.rsqrt %13 : vector<32x1xf32>
    %15 = arith.mulf %2, %14 : vector<32x1xf32>
    %16 = arith.mulf %5, %15 : vector<32x1xf32>
    %17 = arith.subf %3, %16 : vector<32x1xf32>
    %c0_10 = arith.constant 0 : index
    %c0_11 = arith.constant 0 : index
    %18 = vector.load %arg1[%c0_10, %c0_11] : memref<32x384xf32, #tpu.memory_space<vmem>>, vector<32x384xf32>
    %19 = vector.broadcast %15 : vector<32x1xf32> to vector<32x384xf32>
    %20 = arith.mulf %18, %19 : vector<32x384xf32>
    %21 = vector.broadcast %17 : vector<32x1xf32> to vector<32x384xf32>
    %22 = arith.addf %20, %21 : vector<32x384xf32>
    %c0_12 = arith.constant 0 : index
    %c0_13 = arith.constant 0 : index
    %23 = vector.load %arg6[%c0_12, %c0_13] : memref<32x384xf32, #tpu.memory_space<vmem>>, vector<32x384xf32>
    %24 = arith.addf %22, %23 : vector<32x384xf32>
    %cst_14 = arith.constant 0.000000e+00 : f32
    %25 = vector.broadcast %cst_14 : f32 to vector<32x384xf32>
    %26 = arith.maximumf %24, %25 : vector<32x384xf32>
    %c0_15 = arith.constant 0 : index
    %c0_16 = arith.constant 0 : index
    %27 = vector.load %arg7[%c0_15, %c0_16] : memref<32x384xf32, #tpu.memory_space<vmem>>, vector<32x384xf32>
    tpu.vector_store %arg7[%c0_15, %c0_16], %26 {strides = array<i32>} : memref<32x384xf32, #tpu.memory_space<vmem>>, vector<32x384xf32>,
    return
  }
  func.func @transform_0(%arg0: i32) -> (i32, i32) {
    %c0_i32 = arith.constant 0 : i32
    %c0_i32_0 = arith.constant 0 : i32
    return %c0_i32, %arg0 : i32, i32
  }
  func.func @transform_1(%arg0: i32) -> (i32, i32) {
    %c0_i32 = arith.constant 0 : i32
    %c0_i32_0 = arith.constant 0 : i32
    %c0_i32_1 = arith.constant 0 : i32
    return %c0_i32, %c0_i32_0 : i32, i32
  }
  func.func @transform_2(%arg0: i32) -> (i32, i32) {
    %c0_i32 = arith.constant 0 : i32
    %c0_i32_0 = arith.constant 0 : i32
    %c0_i32_1 = arith.constant 0 : i32
    return %c0_i32, %c0_i32_0 : i32, i32
  }
  func.func @transform_3(%arg0: i32) -> (i32, i32) {
    %c0_i32 = arith.constant 0 : i32
    %c0_i32_0 = arith.constant 0 : i32
    %c0_i32_1 = arith.constant 0 : i32
    return %c0_i32, %c0_i32_0 : i32, i32
  }
  func.func @transform_4(%arg0: i32) -> (i32, i32) {
    %c0_i32 = arith.constant 0 : i32
    %c0_i32_0 = arith.constant 0 : i32
    %c0_i32_1 = arith.constant 0 : i32
    return %c0_i32, %c0_i32_0 : i32, i32
  }
  func.func @transform_5(%arg0: i32) -> (i32, i32) {
    %c0_i32 = arith.constant 0 : i32
    %c0_i32_0 = arith.constant 0 : i32
    return %c0_i32, %arg0 : i32, i32
  }
  func.func @transform_6(%arg0: i32) -> (i32, i32) {
    %c0_i32 = arith.constant 0 : i32
    %c0_i32_0 = arith.constant 0 : i32
    return %c0_i32, %arg0 : i32, i32
  }
}

</mosaic_0001>

<llo_original>
// kernel: res_block_dilated.5
$region0: #{res_block_dilated.5}
  #allocation0 [shape = 'u32[]', space=smem, size = 0x4, offset = 0x4, fixed_abs, tag = 'smem constant byte address 0x4 - core index']
  #allocation1 [shape = 'u32[144,128]{1,0:T(1,128)}', space=vmem, size = 0x12000, scoped, tag = 'internal scratch']
  %s0 = inlined_call_operand.vmem [shape: f32[32,384], index: 0, kind: input, shape index: {}]
  %s1 = inlined_call_operand.vmem [shape: f32[32,1], index: 1, kind: input, shape index: {}]
  %s2 = inlined_call_operand.vmem [shape: f32[32,1], index: 2, kind: input, shape index: {}]
  %s3 = inlined_call_operand.vmem [shape: f32[32,1], index: 3, kind: input, shape index: {}]
  %s4 = inlined_call_operand.vmem [shape: f32[32,1], index: 4, kind: input, shape index: {}]
  %s5 = inlined_call_operand.vmem [shape: f32[32,384], index: 5, kind: input, shape index: {}]
  %s6 = inlined_call_operand.vmem [shape: f32[32,384], index: 6, kind: output, shape index: {}]
  %s7 = sld [smem:[#allocation0]]
  $region34: #{res_block_dilated.5} parent=0
    _
  %s9 = ssub.s32 1, %s7
  %s10 = scalar_select 0, %s9, %s7
  // Predicated region
  $region2: #{res_block_dilated.5} parent=0 // pred_check
    _
  $region3: #{res_block_dilated.5} parent=0 // pred_check_branch
    %12 = sbr.rel (0) target = $region5
  $region4: #{res_block_dilated.5} parent=0 // pred_region
    _
  $region5: #{res_block_dilated.5} parent=0 // pred_fallthru
    _
  // Predicated region
  $region6: #{res_block_dilated.5} parent=0 // pred_check
    _
  $region7: #{res_block_dilated.5} parent=0 // pred_check_branch
    %14 = sbr.rel (0) target = $region9
  $region8: #{res_block_dilated.5} parent=0 // pred_region
    _
  $region9: #{res_block_dilated.5} parent=0 // pred_fallthru
    _
  // Predicated region
  $region10: #{res_block_dilated.5} parent=0 // pred_check
    _
  $region11: #{res_block_dilated.5} parent=0 // pred_check_branch
    %16 = sbr.rel (0) target = $region13
  $region12: #{res_block_dilated.5} parent=0 // pred_region
    _
  $region13: #{res_block_dilated.5} parent=0 // pred_fallthru
    _
  // Predicated region
  $region14: #{res_block_dilated.5} parent=0 // pred_check
    _
  $region15: #{res_block_dilated.5} parent=0 // pred_check_branch
    %18 = sbr.rel (0) target = $region17
  $region16: #{res_block_dilated.5} parent=0 // pred_region
    _
  $region17: #{res_block_dilated.5} parent=0 // pred_fallthru
    _
  // Predicated region
  $region18: #{res_block_dilated.5} parent=0 // pred_check
    _
  $region19: #{res_block_dilated.5} parent=0 // pred_check_branch
    %20 = sbr.rel (0) target = $region21
  $region20: #{res_block_dilated.5} parent=0 // pred_region
    _
  $region21: #{res_block_dilated.5} parent=0 // pred_fallthru
    _
  // Predicated region
  $region22: #{res_block_dilated.5} parent=0 // pred_check
    _
  $region23: #{res_block_dilated.5} parent=0 // pred_check_branch
    %22 = sbr.rel (0) target = $region25
  $region24: #{res_block_dilated.5} parent=0 // pred_region
    _
  $region25: #{res_block_dilated.5} parent=0 // pred_fallthru
    _
  %v23 = vld [vmem:[%s1] sm:$0xff]
  %v24 = vld [vmem:[%s1 + $0x8] sm:$0xff]
  %v25 = vld [vmem:[%s1 + $0x10] sm:$0xff]
  %v26 = vld [vmem:[%s1 + $0x18] sm:$0xff]
  %v27 = vld [vmem:[%s2] sm:$0xff]
  %v28 = vld [vmem:[%s2 + $0x8] sm:$0xff]
  %v29 = vld [vmem:[%s2 + $0x10] sm:$0xff]
  %v30 = vld [vmem:[%s2 + $0x18] sm:$0xff]
  %v31 = vld [vmem:[%s3] sm:$0xff]
  %v32 = vld [vmem:[%s3 + $0x8] sm:$0xff]
  %v33 = vld [vmem:[%s3 + $0x10] sm:$0xff]
  %v34 = vld [vmem:[%s3 + $0x18] sm:$0xff]
  %v35 = vld [vmem:[%s4] sm:$0xff]
  %v36 = vld [vmem:[%s4 + $0x8] sm:$0xff]
  %v37 = vld [vmem:[%s4 + $0x10] sm:$0xff]
  %v38 = vld [vmem:[%s4 + $0x18] sm:$0xff]
  %v39 = vmul.f32 %v23, 0.013888889
  %v40 = vmul.f32 %v24, 0.013888889
  %v41 = vmul.f32 %v25, 0.013888889
  %v42 = vmul.f32 %v26, 0.013888889
  %v43 = vmul.f32 %v27, 0.013888889
  %v44 = vmul.f32 %v28, 0.013888889
  %v45 = vmul.f32 %v29, 0.013888889
  %v46 = vmul.f32 %v30, 0.013888889
  %v47 = vmul.f32 %v39, %v39
  %v48 = vmul.f32 %v40, %v40
  %v49 = vmul.f32 %v41, %v41
  %v50 = vmul.f32 %v42, %v42
  %v51 = vsub.f32 %v43, %v47
  %v52 = vsub.f32 %v44, %v48
  %v53 = vsub.f32 %v45, %v49
  %v54 = vsub.f32 %v46, %v50
  %v55 = vmax.f32 %v51, 0.0
  %v56 = vmax.f32 %v52, 0.0
  %v57 = vmax.f32 %v53, 0.0
  %v58 = vmax.f32 %v54, 0.0
  %v59 = vadd.f32 %v55, 1e-05
  %v60 = vadd.f32 %v56, 1e-05
  %v61 = vadd.f32 %v57, 1e-05
  %v62 = vadd.f32 %v58, 1e-05
  %v63 = vrsqrt.pop %v59
  %v64 = vrsqrt.pop %v60
  %v65 = vrsqrt.pop %v61
  %v66 = vrsqrt.pop %v62
  %v67 = vmul.f32 %v31, %v63
  %v68 = vmul.f32 %v32, %v64
  %v69 = vmul.f32 %v33, %v65
  %v70 = vmul.f32 %v34, %v66
  %v71 = vmul.f32 %v39, %v67
  %v72 = vmul.f32 %v40, %v68
  %v73 = vmul.f32 %v41, %v69
  %v74 = vmul.f32 %v42, %v70
  %v75 = vsub.f32 %v35, %v71
  %v76 = vsub.f32 %v36, %v72
  %v77 = vsub.f32 %v37, %v73
  %v78 = vsub.f32 %v38, %v74
  %v79 = vld [vmem:[%s0] sm:$0xff]
  %v80 = vld [vmem:[%s0 + $0x8] sm:$0xff]
  %v81 = vld [vmem:[%s0 + $0x10] sm:$0xff]
  %v82 = vld [vmem:[%s0 + $0x18] sm:$0xff]
  %v83 = vld [vmem:[%s0 + $0x20] sm:$0xff]
  %v84 = vld [vmem:[%s0 + $0x28] sm:$0xff]
  %v85 = vld [vmem:[%s0 + $0x30] sm:$0xff]
  %v86 = vld [vmem:[%s0 + $0x38] sm:$0xff]
  %v87 = vld [vmem:[%s0 + $0x40] sm:$0xff]
  %v88 = vld [vmem:[%s0 + $0x48] sm:$0xff]
  %v89 = vld [vmem:[%s0 + $0x50] sm:$0xff]
  %v90 = vld [vmem:[%s0 + $0x58] sm:$0xff]
  %92 = vset.pattern.permute.xlu0 0
  %93 = vperm.xlu0 %92, %v67
  %v94 = vpop.permute.xlu0 %93
  %97 = vset.pattern.permute.xlu0 0
  %98 = vperm.xlu0 %97, %v68
  %v99 = vpop.permute.xlu0 %98
  %102 = vset.pattern.permute.xlu0 0
  %103 = vperm.xlu0 %102, %v69
  %v104 = vpop.permute.xlu0 %103
  %107 = vset.pattern.permute.xlu0 0
  %108 = vperm.xlu0 %107, %v70
  %v109 = vpop.permute.xlu0 %108
  %v111 = vmul.f32 %v79, %v94
  %v112 = vmul.f32 %v80, %v94
  %v113 = vmul.f32 %v81, %v94
  %v114 = vmul.f32 %v82, %v99
  %v115 = vmul.f32 %v83, %v99
  %v116 = vmul.f32 %v84, %v99
  %v117 = vmul.f32 %v85, %v104
  %v118 = vmul.f32 %v86, %v104
  %v119 = vmul.f32 %v87, %v104
  %v120 = vmul.f32 %v88, %v109
  %v121 = vmul.f32 %v89, %v109
  %v122 = vmul.f32 %v90, %v109
  %124 = vset.pattern.permute.xlu0 0
  %125 = vperm.xlu0 %124, %v75
  %v126 = vpop.permute.xlu0 %125
  %129 = vset.pattern.permute.xlu0 0
  %130 = vperm.xlu0 %129, %v76
  %v131 = vpop.permute.xlu0 %130
  %134 = vset.pattern.permute.xlu0 0
  %135 = vperm.xlu0 %134, %v77
  %v136 = vpop.permute.xlu0 %135
  %139 = vset.pattern.permute.xlu0 0
  %140 = vperm.xlu0 %139, %v78
  %v141 = vpop.permute.xlu0 %140
  %v143 = vadd.f32 %v111, %v126
  %v144 = vadd.f32 %v112, %v126
  %v145 = vadd.f32 %v113, %v126
  %v146 = vadd.f32 %v114, %v131
  %v147 = vadd.f32 %v115, %v131
  %v148 = vadd.f32 %v116, %v131
  %v149 = vadd.f32 %v117, %v136
  %v150 = vadd.f32 %v118, %v136
  %v151 = vadd.f32 %v119, %v136
  %v152 = vadd.f32 %v120, %v141
  %v153 = vadd.f32 %v121, %v141
  %v154 = vadd.f32 %v122, %v141
  %v155 = vld [vmem:[%s5] sm:$0xff]
  %v156 = vld [vmem:[%s5 + $0x8] sm:$0xff]
  %v157 = vld [vmem:[%s5 + $0x10] sm:$0xff]
  %v158 = vld [vmem:[%s5 + $0x18] sm:$0xff]
  %v159 = vld [vmem:[%s5 + $0x20] sm:$0xff]
  %v160 = vld [vmem:[%s5 + $0x28] sm:$0xff]
  %v161 = vld [vmem:[%s5 + $0x30] sm:$0xff]
  %v162 = vld [vmem:[%s5 + $0x38] sm:$0xff]
  %v163 = vld [vmem:[%s5 + $0x40] sm:$0xff]
  %v164 = vld [vmem:[%s5 + $0x48] sm:$0xff]
  %v165 = vld [vmem:[%s5 + $0x50] sm:$0xff]
  %v166 = vld [vmem:[%s5 + $0x58] sm:$0xff]
  %v167 = vadd.f32 %v143, %v155
  %v168 = vadd.f32 %v144, %v156
  %v169 = vadd.f32 %v145, %v157
  %v170 = vadd.f32 %v146, %v158
  %v171 = vadd.f32 %v147, %v159
  %v172 = vadd.f32 %v148, %v160
  %v173 = vadd.f32 %v149, %v161
  %v174 = vadd.f32 %v150, %v162
  %v175 = vadd.f32 %v151, %v163
  %v176 = vadd.f32 %v152, %v164
  %v177 = vadd.f32 %v153, %v165
  %v178 = vadd.f32 %v154, %v166
  %v179 = vmax.f32 %v167, 0.0
  %v180 = vmax.f32 %v168, 0.0
  %v181 = vmax.f32 %v169, 0.0
  %v182 = vmax.f32 %v170, 0.0
  %v183 = vmax.f32 %v171, 0.0
  %v184 = vmax.f32 %v172, 0.0
  %v185 = vmax.f32 %v173, 0.0
  %v186 = vmax.f32 %v174, 0.0
  %v187 = vmax.f32 %v175, 0.0
  %v188 = vmax.f32 %v176, 0.0
  %v189 = vmax.f32 %v177, 0.0
  %v190 = vmax.f32 %v178, 0.0
  %191 = vst [vmem:[%s6] sm:$0xff] %v179
  %192 = vst [vmem:[%s6 + $0x8] sm:$0xff] %v180
  %193 = vst [vmem:[%s6 + $0x10] sm:$0xff] %v181
  %194 = vst [vmem:[%s6 + $0x18] sm:$0xff] %v182
  %195 = vst [vmem:[%s6 + $0x20] sm:$0xff] %v183
  %196 = vst [vmem:[%s6 + $0x28] sm:$0xff] %v184
  %197 = vst [vmem:[%s6 + $0x30] sm:$0xff] %v185
  %198 = vst [vmem:[%s6 + $0x38] sm:$0xff] %v186
  %199 = vst [vmem:[%s6 + $0x40] sm:$0xff] %v187
  %200 = vst [vmem:[%s6 + $0x48] sm:$0xff] %v188
  %201 = vst [vmem:[%s6 + $0x50] sm:$0xff] %v189
  %202 = vst [vmem:[%s6 + $0x58] sm:$0xff] %v190
  // Predicated region
  $region26: #{res_block_dilated.5} parent=0 // pred_check
    _
  $region27: #{res_block_dilated.5} parent=0 // pred_check_branch
    %204 = sbr.rel (0) target = $region29
  $region28: #{res_block_dilated.5} parent=0 // pred_region
    _
  $region29: #{res_block_dilated.5} parent=0 // pred_fallthru
    _
  // Predicated region
  $region30: #{res_block_dilated.5} parent=0 // pred_check
    _
  $region31: #{res_block_dilated.5} parent=0 // pred_check_branch
    %206 = sbr.rel (0) target = $region33
  $region32: #{res_block_dilated.5} parent=0 // pred_region
    _
  $region33: #{res_block_dilated.5} parent=0 // pred_fallthru
    _

// kernel: res_block_dilated.3
$region0: #{res_block_dilated.3}
  #allocation0 [shape = 'u32[]', space=smem, size = 0x4, offset = 0x4, fixed_abs, tag = 'smem constant byte address 0x4 - core index']
  #allocation1 [shape = 'u32[144,128]{1,0:T(1,128)}', space=vmem, size = 0x12000, scoped, tag = 'internal scratch']
  %s0 = inlined_call_operand.vmem [shape: f32[32,384], index: 0, kind: input, shape index: {}]
  %s1 = inlined_call_operand.vmem [shape: f32[32,96], index: 1, kind: input, shape index: {}]
  %s2 = inlined_call_operand.vmem [shape: f32[1,384], index: 2, kind: input, shape index: {}]
  %s3 = inlined_call_operand.vmem [shape: f32[32,384], index: 3, kind: output, shape index: {0}]
  %s4 = inlined_call_operand.vmem [shape: f32[32,1], index: 4, kind: output, shape index: {1}]
  %s5 = inlined_call_operand.vmem [shape: f32[32,1], index: 5, kind: output, shape index: {2}]
  %6 = xla_tuple %s3, %s4, %s5
  %s7 = sld [smem:[#allocation0]]
  $region42: #{res_block_dilated.3} parent=0
    _
  %s9 = ssub.s32 1, %s7
  %s10 = scalar_select 0, %s9, %s7
  // Predicated region
  $region2: #{res_block_dilated.3} parent=0 // pred_check
    _
  $region3: #{res_block_dilated.3} parent=0 // pred_check_branch
    %12 = sbr.rel (0) target = $region5
  $region4: #{res_block_dilated.3} parent=0 // pred_region
    _
  $region5: #{res_block_dilated.3} parent=0 // pred_fallthru
    _
  // Predicated region
  $region6: #{res_block_dilated.3} parent=0 // pred_check
    _
  $region7: #{res_block_dilated.3} parent=0 // pred_check_branch
    %14 = sbr.rel (0) target = $region9
  $region8: #{res_block_dilated.3} parent=0 // pred_region
    _
  $region9: #{res_block_dilated.3} parent=0 // pred_fallthru
    _
  // Predicated region
  $region10: #{res_block_dilated.3} parent=0 // pred_check
    _
  $region11: #{res_block_dilated.3} parent=0 // pred_check_branch
    %16 = sbr.rel (0) target = $region13
  $region12: #{res_block_dilated.3} parent=0 // pred_region
    _
  $region13: #{res_block_dilated.3} parent=0 // pred_fallthru
    _
  %v17 = vld [vmem:[%s0] sm:$0xff]
  %v18 = vld [vmem:[%s0 + $0x8] sm:$0xff]
  %v19 = vld [vmem:[%s0 + $0x10] sm:$0xff]
  %v20 = vld [vmem:[%s0 + $0x18] sm:$0xff]
  %v21 = vld [vmem:[%s0 + $0x20] sm:$0xff]
  %v22 = vld [vmem:[%s0 + $0x28] sm:$0xff]
  %v23 = vld [vmem:[%s0 + $0x30] sm:$0xff]
  %v24 = vld [vmem:[%s0 + $0x38] sm:$0xff]
  %v25 = vld [vmem:[%s0 + $0x40] sm:$0xff]
  %v26 = vld [vmem:[%s0 + $0x48] sm:$0xff]
  %v27 = vld [vmem:[%s0 + $0x50] sm:$0xff]
  %v28 = vld [vmem:[%s0 + $0x58] sm:$0xff]
  %29 = vrot.lane.b32.xlu0 %v17, 2
  %v30 = vpop.permute.xlu0 %29
  %31 = vrot.lane.b32.xlu0 %v20, 2
  %v32 = vpop.permute.xlu0 %31
  %33 = vrot.lane.b32.xlu0 %v23, 2
  %v34 = vpop.permute.xlu0 %33
  %35 = vrot.lane.b32.xlu0 %v26, 2
  %v36 = vpop.permute.xlu0 %35
  %37 = vrot.lane.b32.xlu0 %v18, 2
  %v38 = vpop.permute.xlu0 %37
  %39 = vrot.lane.b32.xlu0 %v21, 2
  %v40 = vpop.permute.xlu0 %39
  %41 = vrot.lane.b32.xlu0 %v24, 2
  %v42 = vpop.permute.xlu0 %41
  %43 = vrot.lane.b32.xlu0 %v27, 2
  %v44 = vpop.permute.xlu0 %43
  %45 = vrot.lane.b32.xlu0 %v19, 2
  %v46 = vpop.permute.xlu0 %45
  %47 = vrot.lane.b32.xlu0 %v22, 2
  %v48 = vpop.permute.xlu0 %47
  %49 = vrot.lane.b32.xlu0 %v25, 2
  %v50 = vpop.permute.xlu0 %49
  %51 = vrot.lane.b32.xlu0 %v28, 2
  %v52 = vpop.permute.xlu0 %51
  %v53 = vlaneseq
  %v54 = vand.u32 %v53, 127
  %vm55 = vcmp.lt.s32.totalorder %v54, 2
  %v56 = vsel %vm55, %v38, %v46
  %v57 = vsel %vm55, %v40, %v48
  %v58 = vsel %vm55, %v42, %v50
  %v59 = vsel %vm55, %v44, %v52
  %v60 = vsel %vm55, %v30, %v38
  %v61 = vsel %vm55, %v32, %v40
  %v62 = vsel %vm55, %v34, %v42
  %v63 = vsel %vm55, %v36, %v44
  %v64 = vsel %vm55, %v46, %v30
  %v65 = vsel %vm55, %v48, %v32
  %v66 = vsel %vm55, %v50, %v34
  %v67 = vsel %vm55, %v52, %v36
  %68 = vrot.lane.b32.xlu0 %v17, 126
  %v69 = vpop.permute.xlu0 %68
  %70 = vrot.lane.b32.xlu0 %v20, 126
  %v71 = vpop.permute.xlu0 %70
  %72 = vrot.lane.b32.xlu0 %v23, 126
  %v73 = vpop.permute.xlu0 %72
  %74 = vrot.lane.b32.xlu0 %v26, 126
  %v75 = vpop.permute.xlu0 %74
  %76 = vrot.lane.b32.xlu0 %v18, 126
  %v77 = vpop.permute.xlu0 %76
  %78 = vrot.lane.b32.xlu0 %v21, 126
  %v79 = vpop.permute.xlu0 %78
  %80 = vrot.lane.b32.xlu0 %v24, 126
  %v81 = vpop.permute.xlu0 %80
  %82 = vrot.lane.b32.xlu0 %v27, 126
  %v83 = vpop.permute.xlu0 %82
  %84 = vrot.lane.b32.xlu0 %v19, 126
  %v85 = vpop.permute.xlu0 %84
  %86 = vrot.lane.b32.xlu0 %v22, 126
  %v87 = vpop.permute.xlu0 %86
  %88 = vrot.lane.b32.xlu0 %v25, 126
  %v89 = vpop.permute.xlu0 %88
  %90 = vrot.lane.b32.xlu0 %v28, 126
  %v91 = vpop.permute.xlu0 %90
  %vm92 = vcmp.lt.s32.totalorder %v54, 126
  %v93 = vsel %vm92, %v77, %v85
  %v94 = vsel %vm92, %v79, %v87
  %v95 = vsel %vm92, %v81, %v89
  %v96 = vsel %vm92, %v83, %v91
  %v97 = vsel %vm92, %v69, %v77
  %v98 = vsel %vm92, %v71, %v79
  %v99 = vsel %vm92, %v73, %v81
  %v100 = vsel %vm92, %v75, %v83
  %v101 = vsel %vm92, %v85, %v69
  %v102 = vsel %vm92, %v87, %v71
  %v103 = vsel %vm92, %v89, %v73
  %v104 = vsel %vm92, %v91, %v75
  %v105 = vld [vmem:[%s1] sm:$0xff]
  %v106 = vld [vmem:[%s1 + $0x8] sm:$0xff]
  %v107 = vld [vmem:[%s1 + $0x10] sm:$0xff]
  %v108 = vld [vmem:[%s1 + $0x18] sm:$0xff]
  %vm109 = vcmask 785408
  %v111 = vsel %vm109, %v105, 0
  %v114 = vsel %vm109, %v106, 0
  %v117 = vsel %vm109, %v107, 0
  %v120 = vsel %vm109, %v108, 0
  %122 = vmatprep.subr.mxu0 0.0
  %123 = vmatpush1.msra.mxu0 0.0
  %124 = vmatprep.subr.mxu0 0.0
  %125 = vmatpush1.msra.mxu0 0.0
  %126 = vmatprep.subr.mxu0 0.0
  %127 = vmatpush1.msra.mxu0 0.0
  %128 = vmatprep.subr.mxu0 0.0
  %129 = vmatpush1.msra.mxu0 0.0
  %130 = vmatprep.subr.mxu0 %v96
  %131 = vmatpush1.msra.mxu0 %v100
  %132 = vmatprep.subr.mxu0 %v95
  %133 = vmatpush1.msra.mxu0 %v99
  %134 = vmatprep.subr.mxu0 %v94
  %135 = vmatpush1.msra.mxu0 %v98
  %136 = vmatprep.subr.mxu0 %v93
  %137 = vmatpush1.msra.mxu0 %v97
  %138 = vmatprep.subr.mxu0 %v27
  %139 = vmatpush1.msra.mxu0 %v26
  %140 = vmatprep.subr.mxu0 %v24
  %141 = vmatpush1.msra.mxu0 %v23
  %142 = vmatprep.subr.mxu0 %v21
  %143 = vmatpush1.msra.mxu0 %v20
  %144 = vmatprep.subr.mxu0 %v18
  %145 = vmatpush1.msra.mxu0 %v17
  %146 = vmatprep.subr.mxu0 %v63
  %147 = vmatpush1.msra.mxu0 %v67
  %148 = vmatprep.subr.mxu0 %v62
  %149 = vmatpush1.msra.mxu0 %v66
  %150 = vmatprep.subr.mxu0 %v61
  %151 = vmatpush1.msra.mxu0 %v65
  %152 = vmatprep.subr.mxu0 %v60
  %153 = vmatpush1.msra.mxu0 %v64
  %154 = vmatprep.subr.mxu0 0.0
  %155 = vmatpush2.msra.mxu0 0.0
  %156 = vmatprep.subr.mxu0 0.0
  %157 = vmatpush2.msra.mxu0 0.0
  %158 = vmatprep.subr.mxu0 0.0
  %159 = vmatpush2.msra.mxu0 0.0
  %160 = vmatprep.subr.mxu0 0.0
  %161 = vmatpush2.msra.mxu0 0.0
  %162 = vmatprep.subr.mxu0 0.0
  %163 = vmatpush2.msra.mxu0 0.0
  %164 = vmatprep.subr.mxu0 0.0
  %165 = vmatpush2.msra.mxu0 0.0
  %166 = vmatprep.subr.mxu0 0.0
  %167 = vmatpush2.msra.mxu0 0.0
  %168 = vmatprep.subr.mxu0 0.0
  %169 = vmatpush2.msra.mxu0 0.0
  %170 = vmatprep.subr.mxu0 0.0
  %171 = vmatpush2.msra.mxu0 0.0
  %172 = vmatprep.subr.mxu0 0.0
  %173 = vmatpush2.msra.mxu0 0.0
  %174 = vmatprep.subr.mxu0 0.0
  %175 = vmatpush2.msra.mxu0 0.0
  %176 = vmatprep.subr.mxu0 0.0
  %177 = vmatpush2.msra.mxu0 0.0
  %178 = vmatprep.subr.mxu0 0.0
  %179 = vmatpush2.msra.mxu0 0.0
  %180 = vmatprep.subr.mxu0 0.0
  %181 = vmatpush2.msra.mxu0 0.0
  %182 = vmatprep.subr.mxu0 0.0
  %183 = vmatpush2.msra.mxu0 0.0
  %184 = vmatprep.subr.mxu0 0.0
  %185 = vmatpush2.msra.mxu0 0.0
  %186 = vmatprep.mubr.f32.mxu0 0.0
  %187 = vmatmul.mubr.f32.gmra.mxu0 %v111
  %v188 = vpop.f32.mrf.mxu0
  %v189 = vadd.f32 0.0, %v188
  %v190 = vpop.f32.mrf.mxu0
  %v191 = vadd.f32 0.0, %v190
  %192 = vmatprep.mubr.f32.mxu0 0.0
  %193 = vmatmul.mubr.f32.gmra.mxu0 %v114
  %v194 = vpop.f32.mrf.mxu0
  %v195 = vadd.f32 0.0, %v194
  %v196 = vpop.f32.mrf.mxu0
  %v197 = vadd.f32 0.0, %v196
  %198 = vmatprep.mubr.f32.mxu0 0.0
  %199 = vmatmul.mubr.f32.gmra.mxu0 %v117
  %v200 = vpop.f32.mrf.mxu0
  %v201 = vadd.f32 0.0, %v200
  %v202 = vpop.f32.mrf.mxu0
  %v203 = vadd.f32 0.0, %v202
  %204 = vmatprep.mubr.f32.mxu0 0.0
  %205 = vmatmul.mubr.f32.gmra.mxu0 %v120
  %v206 = vpop.f32.mrf.mxu0
  %v207 = vadd.f32 0.0, %v206
  %v208 = vpop.f32.mrf.mxu0
  %v209 = vadd.f32 0.0, %v208
  %210 = vdwg.mxu0
  %211 = vmatprep.subr.mxu0 0.0
  %212 = vmatpush1.msra.mxu0 0.0
  %213 = vmatprep.subr.mxu0 0.0
  %214 = vmatpush1.msra.mxu0 0.0
  %215 = vmatprep.subr.mxu0 0.0
  %216 = vmatpush1.msra.mxu0 0.0
  %217 = vmatprep.subr.mxu0 0.0
  %218 = vmatpush1.msra.mxu0 0.0
  %219 = vmatprep.subr.mxu0 0.0
  %220 = vmatpush1.msra.mxu0 %v104
  %221 = vmatprep.subr.mxu0 0.0
  %222 = vmatpush1.msra.mxu0 %v103
  %223 = vmatprep.subr.mxu0 0.0
  %224 = vmatpush1.msra.mxu0 %v102
  %225 = vmatprep.subr.mxu0 0.0
  %226 = vmatpush1.msra.mxu0 %v101
  %227 = vmatprep.subr.mxu0 0.0
  %228 = vmatpush1.msra.mxu0 %v28
  %229 = vmatprep.subr.mxu0 0.0
  %230 = vmatpush1.msra.mxu0 %v25
  %231 = vmatprep.subr.mxu0 0.0
  %232 = vmatpush1.msra.mxu0 %v22
  %233 = vmatprep.subr.mxu0 0.0
  %234 = vmatpush1.msra.mxu0 %v19
  %235 = vmatprep.subr.mxu0 0.0
  %236 = vmatpush1.msra.mxu0 %v59
  %237 = vmatprep.subr.mxu0 0.0
  %238 = vmatpush1.msra.mxu0 %v58
  %239 = vmatprep.subr.mxu0 0.0
  %240 = vmatpush1.msra.mxu0 %v57
  %241 = vmatprep.subr.mxu0 0.0
  %242 = vmatpush1.msra.mxu0 %v56
  %243 = vmatprep.subr.mxu0 0.0
  %244 = vmatpush2.msra.mxu0 0.0
  %245 = vmatprep.subr.mxu0 0.0
  %246 = vmatpush2.msra.mxu0 0.0
  %247 = vmatprep.subr.mxu0 0.0
  %248 = vmatpush2.msra.mxu0 0.0
  %249 = vmatprep.subr.mxu0 0.0
  %250 = vmatpush2.msra.mxu0 0.0
  %251 = vmatprep.subr.mxu0 0.0
  %252 = vmatpush2.msra.mxu0 0.0
  %253 = vmatprep.subr.mxu0 0.0
  %254 = vmatpush2.msra.mxu0 0.0
  %255 = vmatprep.subr.mxu0 0.0
  %256 = vmatpush2.msra.mxu0 0.0
  %257 = vmatprep.subr.mxu0 0.0
  %258 = vmatpush2.msra.mxu0 0.0
  %259 = vmatprep.subr.mxu0 0.0
  %260 = vmatpush2.msra.mxu0 0.0
  %261 = vmatprep.subr.mxu0 0.0
  %262 = vmatpush2.msra.mxu0 0.0
  %263 = vmatprep.subr.mxu0 0.0
  %264 = vmatpush2.msra.mxu0 0.0
  %265 = vmatprep.subr.mxu0 0.0
  %266 = vmatpush2.msra.mxu0 0.0
  %267 = vmatprep.subr.mxu0 0.0
  %268 = vmatpush2.msra.mxu0 0.0
  %269 = vmatprep.subr.mxu0 0.0
  %270 = vmatpush2.msra.mxu0 0.0
  %271 = vmatprep.subr.mxu0 0.0
  %272 = vmatpush2.msra.mxu0 0.0
  %273 = vmatprep.subr.mxu0 0.0
  %274 = vmatpush2.msra.mxu0 0.0
  %275 = vmatprep.mubr.f32.mxu0 0.0
  %276 = vmatmul.mubr.f32.gmra.mxu0 %v111
  %v277 = vpop.f32.mrf.mxu0
  %v278 = vadd.f32 0.0, %v277
  %v279 = vpop.f32.mrf.mxu0
  %280 = vmatprep.mubr.f32.mxu0 0.0
  %281 = vmatmul.mubr.f32.gmra.mxu0 %v114
  %v282 = vpop.f32.mrf.mxu0
  %v283 = vadd.f32 0.0, %v282
  %v284 = vpop.f32.mrf.mxu0
  %285 = vmatprep.mubr.f32.mxu0 0.0
  %286 = vmatmul.mubr.f32.gmra.mxu0 %v117
  %v287 = vpop.f32.mrf.mxu0
  %v288 = vadd.f32 0.0, %v287
  %v289 = vpop.f32.mrf.mxu0
  %290 = vmatprep.mubr.f32.mxu0 0.0
  %291 = vmatmul.mubr.f32.gmra.mxu0 %v120
  %v292 = vpop.f32.mrf.mxu0
  %v293 = vadd.f32 0.0, %v292
  %v294 = vpop.f32.mrf.mxu0
  %295 = vdwg.mxu0
  %v296 = vld [vmem:[%s2] sm:$0x7]
  %v298 = vlaneseq
  %v299 = vshrl.u32 %v298, 7
  %v300 = vsub.s32 0, %v299
  %v301 = vrot.slane %v296, %v300
  %v302 = vlaneseq
  %v303 = vshrl.u32 %v302, 7
  %v304 = vsub.s32 1, %v303
  %v305 = vrot.slane %v296, %v304
  %v306 = vlaneseq
  %v307 = vshrl.u32 %v306, 7
  %v308 = vsub.s32 2, %v307
  %v309 = vrot.slane %v296, %v308
  %v313 = vmul.f32 %v189, %v301
  %v314 = vmul.f32 %v191, %v305
  %v315 = vmul.f32 %v278, %v309
  %v316 = vmul.f32 %v195, %v301
  %v317 = vmul.f32 %v197, %v305
  %v318 = vmul.f32 %v283, %v309
  %v319 = vmul.f32 %v201, %v301
  %v320 = vmul.f32 %v203, %v305
  %v321 = vmul.f32 %v288, %v309
  %v322 = vmul.f32 %v207, %v301
  %v323 = vmul.f32 %v209, %v305
  %v324 = vmul.f32 %v293, %v309
  %325 = vst [vmem:[%s3] sm:$0xff] %v313
  %326 = vst [vmem:[%s3 + $0x8] sm:$0xff] %v314
  %327 = vst [vmem:[%s3 + $0x10] sm:$0xff] %v315
  %328 = vst [vmem:[%s3 + $0x18] sm:$0xff] %v316
  %329 = vst [vmem:[%s3 + $0x20] sm:$0xff] %v317
  %330 = vst [vmem:[%s3 + $0x28] sm:$0xff] %v318
  %331 = vst [vmem:[%s3 + $0x30] sm:$0xff] %v319
  %332 = vst [vmem:[%s3 + $0x38] sm:$0xff] %v320
  %333 = vst [vmem:[%s3 + $0x40] sm:$0xff] %v321
  %334 = vst [vmem:[%s3 + $0x48] sm:$0xff] %v322
  %335 = vst [vmem:[%s3 + $0x50] sm:$0xff] %v323
  %336 = vst [vmem:[%s3 + $0x58] sm:$0xff] %v324
  %p337 = scmp.eq.s32.totalorder 0, 0
  // Predicated region
  $region14: #{res_block_dilated.3} parent=0 // pred_check
    %p338 = pneg %p337
  $region15: #{res_block_dilated.3} parent=0 // pred_check_branch
    %340 = sbr.rel (%p338) target = $region17
  $region16: #{res_block_dilated.3} parent=0 // pred_region
    %vm341 = vcmask 7168
    %342 = vst.msk [vmem:[%s4] sm:$0xff] %vm341, 0.0
    %343 = vst.msk [vmem:[%s4 + $0x8] sm:$0xff] %vm341, 0.0
    %344 = vst.msk [vmem:[%s4 + $0x10] sm:$0xff] %vm341, 0.0
    %345 = vst.msk [vmem:[%s4 + $0x18] sm:$0xff] %vm341, 0.0
    %346 = vst.msk [vmem:[%s5] sm:$0xff] %vm341, 0.0
    %347 = vst.msk [vmem:[%s5 + $0x8] sm:$0xff] %vm341, 0.0
    %348 = vst.msk [vmem:[%s5 + $0x10] sm:$0xff] %vm341, 0.0
    %349 = vst.msk [vmem:[%s5 + $0x18] sm:$0xff] %vm341, 0.0
  $region17: #{res_block_dilated.3} parent=0 // pred_fallthru
    _
  %v350 = vld [vmem:[%s4] sm:$0xff]
  %v351 = vld [vmem:[%s4 + $0x8] sm:$0xff]
  %v352 = vld [vmem:[%s4 + $0x10] sm:$0xff]
  %v353 = vld [vmem:[%s4 + $0x18] sm:$0xff]
  %v354 = vadd.f32 %v313, %v314
  %v355 = vadd.f32 %v354, %v315
  %356 = vadd.xlane.f32.xlu0 %v355
  %v357 = vpop.xlane.xlu0 %356
  %v358 = vadd.f32 %v316, %v317
  %v359 = vadd.f32 %v358, %v318
  %360 = vadd.xlane.f32.xlu0 %v359
  %v361 = vpop.xlane.xlu0 %360
  %v362 = vadd.f32 %v319, %v320
  %v363 = vadd.f32 %v362, %v321
  %364 = vadd.xlane.f32.xlu0 %v363
  %v365 = vpop.xlane.xlu0 %364
  %v366 = vadd.f32 %v322, %v323
  %v367 = vadd.f32 %v366, %v324
  %368 = vadd.xlane.f32.xlu0 %v367
  %v369 = vpop.xlane.xlu0 %368
  %v370 = vadd.f32 %v350, %v357
  %v371 = vadd.f32 %v351, %v361
  %v372 = vadd.f32 %v352, %v365
  %v373 = vadd.f32 %v353, %v369
  %vm374 = vcmask 7168
  %375 = vst.msk [vmem:[%s4] sm:$0xff] %vm374, %v370
  %376 = vst.msk [vmem:[%s4 + $0x8] sm:$0xff] %vm374, %v371
  %377 = vst.msk [vmem:[%s4 + $0x10] sm:$0xff] %vm374, %v372
  %378 = vst.msk [vmem:[%s4 + $0x18] sm:$0xff] %vm374, %v373
  %v379 = vld [vmem:[%s5] sm:$0xff]
  %v380 = vld [vmem:[%s5 + $0x8] sm:$0xff]
  %v381 = vld [vmem:[%s5 + $0x10] sm:$0xff]
  %v382 = vld [vmem:[%s5 + $0x18] sm:$0xff]
  %v383 = vmul.f32 %v313, %v313
  %v384 = vmul.f32 %v314, %v314
  %v385 = vmul.f32 %v315, %v315
  %v386 = vmul.f32 %v316, %v316
  %v387 = vmul.f32 %v317, %v317
  %v388 = vmul.f32 %v318, %v318
  %v389 = vmul.f32 %v319, %v319
  %v390 = vmul.f32 %v320, %v320
  %v391 = vmul.f32 %v321, %v321
  %v392 = vmul.f32 %v322, %v322
  %v393 = vmul.f32 %v323, %v323
  %v394 = vmul.f32 %v324, %v324
  %v395 = vadd.f32 %v383, %v384
  %v396 = vadd.f32 %v395, %v385
  %397 = vadd.xlane.f32.xlu0 %v396
  %v398 = vpop.xlane.xlu0 %397
  %v399 = vadd.f32 %v386, %v387
  %v400 = vadd.f32 %v399, %v388
  %401 = vadd.xlane.f32.xlu0 %v400
  %v402 = vpop.xlane.xlu0 %401
  %v403 = vadd.f32 %v389, %v390
  %v404 = vadd.f32 %v403, %v391
  %405 = vadd.xlane.f32.xlu0 %v404
  %v406 = vpop.xlane.xlu0 %405
  %v407 = vadd.f32 %v392, %v393
  %v408 = vadd.f32 %v407, %v394
  %409 = vadd.xlane.f32.xlu0 %v408
  %v410 = vpop.xlane.xlu0 %409
  %v411 = vadd.f32 %v379, %v398
  %v412 = vadd.f32 %v380, %v402
  %v413 = vadd.f32 %v381, %v406
  %v414 = vadd.f32 %v382, %v410
  %415 = vst.msk [vmem:[%s5] sm:$0xff] %vm374, %v411
  %416 = vst.msk [vmem:[%s5 + $0x8] sm:$0xff] %vm374, %v412
  %417 = vst.msk [vmem:[%s5 + $0x10] sm:$0xff] %vm374, %v413
  %418 = vst.msk [vmem:[%s5 + $0x18] sm:$0xff] %vm374, %v414
  // Predicated region
  $region18: #{res_block_dilated.3} parent=0 // pred_check
    _
  $region19: #{res_block_dilated.3} parent=0 // pred_check_branch
    %420 = sbr.rel (0) target = $region21
  $region20: #{res_block_dilated.3} parent=0 // pred_region
    _
  $region21: #{res_block_dilated.3} parent=0 // pred_fallthru
    _
  // Predicated region
  $region22: #{res_block_dilated.3} parent=0 // pred_check
    _
  $region23: #{res_block_dilated.3} parent=0 // pred_check_branch
    %422 = sbr.rel (0) target = $region25
  $region24: #{res_block_dilated.3} parent=0 // pred_region
    _
  $region25: #{res_block_dilated.3} parent=0 // pred_fallthru
    _
  // Predicated region
  $region26: #{res_block_dilated.3} parent=0 // pred_check
    _
  $region27: #{res_block_dilated.3} parent=0 // pred_check_branch
    %424 = sbr.rel (0) target = $region29
  $region28: #{res_block_dilated.3} parent=0 // pred_region
    _
  $region29: #{res_block_dilated.3} parent=0 // pred_fallthru
    _
  // Predicated region
  $region30: #{res_block_dilated.3} parent=0 // pred_check
    _
  $region31: #{res_block_dilated.3} parent=0 // pred_check_branch
    %426 = sbr.rel (0) target = $region33
  $region32: #{res_block_dilated.3} parent=0 // pred_region
    _
  $region33: #{res_block_dilated.3} parent=0 // pred_fallthru
    _
  // Predicated region
  $region34: #{res_block_dilated.3} parent=0 // pred_check
    _
  $region35: #{res_block_dilated.3} parent=0 // pred_check_branch
    %428 = sbr.rel (0) target = $region37
  $region36: #{res_block_dilated.3} parent=0 // pred_region
    _
  $region37: #{res_block_dilated.3} parent=0 // pred_fallthru
    _
  // Predicated region
  $region38: #{res_block_dilated.3} parent=0 // pred_check
    _
  $region39: #{res_block_dilated.3} parent=0 // pred_check_branch
    %430 = sbr.rel (0) target = $region41
  $region40: #{res_block_dilated.3} parent=0 // pred_region
    _
  $region41: #{res_block_dilated.3} parent=0 // pred_fallthru
    _

// kernel: res_block_dilated.4
$region0: #{res_block_dilated.4}
  #allocation0 [shape = 'u32[]', space=smem, size = 0x4, offset = 0x4, fixed_abs, tag = 'smem constant byte address 0x4 - core index']
  #allocation1 [shape = 'u32[144,128]{1,0:T(1,128)}', space=vmem, size = 0x12000, scoped, tag = 'internal scratch']
  %s0 = inlined_call_operand.vmem [shape: f32[32,384], index: 0, kind: input, shape index: {}]
  %s1 = inlined_call_operand.vmem [shape: f32[32,1], index: 1, kind: input, shape index: {}]
  %s2 = inlined_call_operand.vmem [shape: f32[32,1], index: 2, kind: input, shape index: {}]
  %s3 = inlined_call_operand.vmem [shape: f32[32,1], index: 3, kind: input, shape index: {}]
  %s4 = inlined_call_operand.vmem [shape: f32[32,1], index: 4, kind: input, shape index: {}]
  %s5 = inlined_call_operand.vmem [shape: f32[32,96], index: 5, kind: input, shape index: {}]
  %s6 = inlined_call_operand.vmem [shape: f32[1,384], index: 6, kind: input, shape index: {}]
  %s7 = inlined_call_operand.vmem [shape: f32[32,384], index: 7, kind: output, shape index: {0}]
  %s8 = inlined_call_operand.vmem [shape: f32[32,1], index: 8, kind: output, shape index: {1}]
  %s9 = inlined_call_operand.vmem [shape: f32[32,1], index: 9, kind: output, shape index: {2}]
  %10 = xla_tuple %s7, %s8, %s9
  %s11 = sld [smem:[#allocation0]]
  $region58: #{res_block_dilated.4} parent=0
    _
  %s13 = ssub.s32 1, %s11
  %s14 = scalar_select 0, %s13, %s11
  // Predicated region
  $region2: #{res_block_dilated.4} parent=0 // pred_check
    _
  $region3: #{res_block_dilated.4} parent=0 // pred_check_branch
    %16 = sbr.rel (0) target = $region5
  $region4: #{res_block_dilated.4} parent=0 // pred_region
    _
  $region5: #{res_block_dilated.4} parent=0 // pred_fallthru
    _
  // Predicated region
  $region6: #{res_block_dilated.4} parent=0 // pred_check
    _
  $region7: #{res_block_dilated.4} parent=0 // pred_check_branch
    %18 = sbr.rel (0) target = $region9
  $region8: #{res_block_dilated.4} parent=0 // pred_region
    _
  $region9: #{res_block_dilated.4} parent=0 // pred_fallthru
    _
  // Predicated region
  $region10: #{res_block_dilated.4} parent=0 // pred_check
    _
  $region11: #{res_block_dilated.4} parent=0 // pred_check_branch
    %20 = sbr.rel (0) target = $region13
  $region12: #{res_block_dilated.4} parent=0 // pred_region
    _
  $region13: #{res_block_dilated.4} parent=0 // pred_fallthru
    _
  // Predicated region
  $region14: #{res_block_dilated.4} parent=0 // pred_check
    _
  $region15: #{res_block_dilated.4} parent=0 // pred_check_branch
    %22 = sbr.rel (0) target = $region17
  $region16: #{res_block_dilated.4} parent=0 // pred_region
    _
  $region17: #{res_block_dilated.4} parent=0 // pred_fallthru
    _
  // Predicated region
  $region18: #{res_block_dilated.4} parent=0 // pred_check
    _
  $region19: #{res_block_dilated.4} parent=0 // pred_check_branch
    %24 = sbr.rel (0) target = $region21
  $region20: #{res_block_dilated.4} parent=0 // pred_region
    _
  $region21: #{res_block_dilated.4} parent=0 // pred_fallthru
    _
  // Predicated region
  $region22: #{res_block_dilated.4} parent=0 // pred_check
    _
  $region23: #{res_block_dilated.4} parent=0 // pred_check_branch
    %26 = sbr.rel (0) target = $region25
  $region24: #{res_block_dilated.4} parent=0 // pred_region
    _
  $region25: #{res_block_dilated.4} parent=0 // pred_fallthru
    _
  // Predicated region
  $region26: #{res_block_dilated.4} parent=0 // pred_check
    _
  $region27: #{res_block_dilated.4} parent=0 // pred_check_branch
    %28 = sbr.rel (0) target = $region29
  $region28: #{res_block_dilated.4} parent=0 // pred_region
    _
  $region29: #{res_block_dilated.4} parent=0 // pred_fallthru
    _
  %v29 = vld [vmem:[%s1] sm:$0xff]
  %v30 = vld [vmem:[%s1 + $0x8] sm:$0xff]
  %v31 = vld [vmem:[%s1 + $0x10] sm:$0xff]
  %v32 = vld [vmem:[%s1 + $0x18] sm:$0xff]
  %v33 = vld [vmem:[%s2] sm:$0xff]
  %v34 = vld [vmem:[%s2 + $0x8] sm:$0xff]
  %v35 = vld [vmem:[%s2 + $0x10] sm:$0xff]
  %v36 = vld [vmem:[%s2 + $0x18] sm:$0xff]
  %v37 = vld [vmem:[%s3] sm:$0xff]
  %v38 = vld [vmem:[%s3 + $0x8] sm:$0xff]
  %v39 = vld [vmem:[%s3 + $0x10] sm:$0xff]
  %v40 = vld [vmem:[%s3 + $0x18] sm:$0xff]
  %v41 = vld [vmem:[%s4] sm:$0xff]
  %v42 = vld [vmem:[%s4 + $0x8] sm:$0xff]
  %v43 = vld [vmem:[%s4 + $0x10] sm:$0xff]
  %v44 = vld [vmem:[%s4 + $0x18] sm:$0xff]
  %v45 = vmul.f32 %v29, 0.013888889
  %v46 = vmul.f32 %v30, 0.013888889
  %v47 = vmul.f32 %v31, 0.013888889
  %v48 = vmul.f32 %v32, 0.013888889
  %v49 = vmul.f32 %v33, 0.013888889
  %v50 = vmul.f32 %v34, 0.013888889
  %v51 = vmul.f32 %v35, 0.013888889
  %v52 = vmul.f32 %v36, 0.013888889
  %v53 = vmul.f32 %v45, %v45
  %v54 = vmul.f32 %v46, %v46
  %v55 = vmul.f32 %v47, %v47
  %v56 = vmul.f32 %v48, %v48
  %v57 = vsub.f32 %v49, %v53
  %v58 = vsub.f32 %v50, %v54
  %v59 = vsub.f32 %v51, %v55
  %v60 = vsub.f32 %v52, %v56
  %v61 = vmax.f32 %v57, 0.0
  %v62 = vmax.f32 %v58, 0.0
  %v63 = vmax.f32 %v59, 0.0
  %v64 = vmax.f32 %v60, 0.0
  %v65 = vadd.f32 %v61, 1e-05
  %v66 = vadd.f32 %v62, 1e-05
  %v67 = vadd.f32 %v63, 1e-05
  %v68 = vadd.f32 %v64, 1e-05
  %v69 = vrsqrt.pop %v65
  %v70 = vrsqrt.pop %v66
  %v71 = vrsqrt.pop %v67
  %v72 = vrsqrt.pop %v68
  %v73 = vmul.f32 %v37, %v69
  %v74 = vmul.f32 %v38, %v70
  %v75 = vmul.f32 %v39, %v71
  %v76 = vmul.f32 %v40, %v72
  %v77 = vmul.f32 %v45, %v73
  %v78 = vmul.f32 %v46, %v74
  %v79 = vmul.f32 %v47, %v75
  %v80 = vmul.f32 %v48, %v76
  %v81 = vsub.f32 %v41, %v77
  %v82 = vsub.f32 %v42, %v78
  %v83 = vsub.f32 %v43, %v79
  %v84 = vsub.f32 %v44, %v80
  %v85 = vld [vmem:[%s6] sm:$0x7]
  %v86 = vld [vmem:[%s0] sm:$0xff]
  %v87 = vld [vmem:[%s0 + $0x8] sm:$0xff]
  %v88 = vld [vmem:[%s0 + $0x10] sm:$0xff]
  %v89 = vld [vmem:[%s0 + $0x18] sm:$0xff]
  %v90 = vld [vmem:[%s0 + $0x20] sm:$0xff]
  %v91 = vld [vmem:[%s0 + $0x28] sm:$0xff]
  %v92 = vld [vmem:[%s0 + $0x30] sm:$0xff]
  %v93 = vld [vmem:[%s0 + $0x38] sm:$0xff]
  %v94 = vld [vmem:[%s0 + $0x40] sm:$0xff]
  %v95 = vld [vmem:[%s0 + $0x48] sm:$0xff]
  %v96 = vld [vmem:[%s0 + $0x50] sm:$0xff]
  %v97 = vld [vmem:[%s0 + $0x58] sm:$0xff]
  %99 = vset.pattern.permute.xlu0 0
  %100 = vperm.xlu0 %99, %v73
  %v101 = vpop.permute.xlu0 %100
  %104 = vset.pattern.permute.xlu0 0
  %105 = vperm.xlu0 %104, %v74
  %v106 = vpop.permute.xlu0 %105
  %109 = vset.pattern.permute.xlu0 0
  %110 = vperm.xlu0 %109, %v75
  %v111 = vpop.permute.xlu0 %110
  %114 = vset.pattern.permute.xlu0 0
  %115 = vperm.xlu0 %114, %v76
  %v116 = vpop.permute.xlu0 %115
  %v118 = vmul.f32 %v86, %v101
  %v119 = vmul.f32 %v87, %v101
  %v120 = vmul.f32 %v88, %v101
  %v121 = vmul.f32 %v89, %v106
  %v122 = vmul.f32 %v90, %v106
  %v123 = vmul.f32 %v91, %v106
  %v124 = vmul.f32 %v92, %v111
  %v125 = vmul.f32 %v93, %v111
  %v126 = vmul.f32 %v94, %v111
  %v127 = vmul.f32 %v95, %v116
  %v128 = vmul.f32 %v96, %v116
  %v129 = vmul.f32 %v97, %v116
  %131 = vset.pattern.permute.xlu0 0
  %132 = vperm.xlu0 %131, %v81
  %v133 = vpop.permute.xlu0 %132
  %136 = vset.pattern.permute.xlu0 0
  %137 = vperm.xlu0 %136, %v82
  %v138 = vpop.permute.xlu0 %137
  %141 = vset.pattern.permute.xlu0 0
  %142 = vperm.xlu0 %141, %v83
  %v143 = vpop.permute.xlu0 %142
  %146 = vset.pattern.permute.xlu0 0
  %147 = vperm.xlu0 %146, %v84
  %v148 = vpop.permute.xlu0 %147
  %v150 = vadd.f32 %v118, %v133
  %v151 = vadd.f32 %v119, %v133
  %v152 = vadd.f32 %v120, %v133
  %v153 = vadd.f32 %v121, %v138
  %v154 = vadd.f32 %v122, %v138
  %v155 = vadd.f32 %v123, %v138
  %v156 = vadd.f32 %v124, %v143
  %v157 = vadd.f32 %v125, %v143
  %v158 = vadd.f32 %v126, %v143
  %v159 = vadd.f32 %v127, %v148
  %v160 = vadd.f32 %v128, %v148
  %v161 = vadd.f32 %v129, %v148
  %v162 = vmax.f32 %v150, 0.0
  %v163 = vmax.f32 %v151, 0.0
  %v164 = vmax.f32 %v152, 0.0
  %v165 = vmax.f32 %v153, 0.0
  %v166 = vmax.f32 %v154, 0.0
  %v167 = vmax.f32 %v155, 0.0
  %v168 = vmax.f32 %v156, 0.0
  %v169 = vmax.f32 %v157, 0.0
  %v170 = vmax.f32 %v158, 0.0
  %v171 = vmax.f32 %v159, 0.0
  %v172 = vmax.f32 %v160, 0.0
  %v173 = vmax.f32 %v161, 0.0
  %v175 = vlaneseq
  %v176 = vshrl.u32 %v175, 7
  %v177 = vsub.s32 0, %v176
  %v178 = vrot.slane %v85, %v177
  %v179 = vlaneseq
  %v180 = vshrl.u32 %v179, 7
  %v181 = vsub.s32 1, %v180
  %v182 = vrot.slane %v85, %v181
  %v183 = vlaneseq
  %v184 = vshrl.u32 %v183, 7
  %v185 = vsub.s32 2, %v184
  %v186 = vrot.slane %v85, %v185
  %v190 = vmul.f32 %v162, %v178
  %v191 = vmul.f32 %v163, %v182
  %v192 = vmul.f32 %v164, %v186
  %v193 = vmul.f32 %v165, %v178
  %v194 = vmul.f32 %v166, %v182
  %v195 = vmul.f32 %v167, %v186
  %v196 = vmul.f32 %v168, %v178
  %v197 = vmul.f32 %v169, %v182
  %v198 = vmul.f32 %v170, %v186
  %v199 = vmul.f32 %v171, %v178
  %v200 = vmul.f32 %v172, %v182
  %v201 = vmul.f32 %v173, %v186
  %202 = vrot.lane.b32.xlu0 %v190, 2
  %v203 = vpop.permute.xlu0 %202
  %204 = vrot.lane.b32.xlu0 %v193, 2
  %v205 = vpop.permute.xlu0 %204
  %206 = vrot.lane.b32.xlu0 %v196, 2
  %v207 = vpop.permute.xlu0 %206
  %208 = vrot.lane.b32.xlu0 %v199, 2
  %v209 = vpop.permute.xlu0 %208
  %210 = vrot.lane.b32.xlu0 %v191, 2
  %v211 = vpop.permute.xlu0 %210
  %212 = vrot.lane.b32.xlu0 %v194, 2
  %v213 = vpop.permute.xlu0 %212
  %214 = vrot.lane.b32.xlu0 %v197, 2
  %v215 = vpop.permute.xlu0 %214
  %216 = vrot.lane.b32.xlu0 %v200, 2
  %v217 = vpop.permute.xlu0 %216
  %218 = vrot.lane.b32.xlu0 %v192, 2
  %v219 = vpop.permute.xlu0 %218
  %220 = vrot.lane.b32.xlu0 %v195, 2
  %v221 = vpop.permute.xlu0 %220
  %222 = vrot.lane.b32.xlu0 %v198, 2
  %v223 = vpop.permute.xlu0 %222
  %224 = vrot.lane.b32.xlu0 %v201, 2
  %v225 = vpop.permute.xlu0 %224
  %v226 = vlaneseq
  %v227 = vand.u32 %v226, 127
  %vm228 = vcmp.lt.s32.totalorder %v227, 2
  %v229 = vsel %vm228, %v211, %v219
  %v230 = vsel %vm228, %v213, %v221
  %v231 = vsel %vm228, %v215, %v223
  %v232 = vsel %vm228, %v217, %v225
  %v233 = vsel %vm228, %v203, %v211
  %v234 = vsel %vm228, %v205, %v213
  %v235 = vsel %vm228, %v207, %v215
  %v236 = vsel %vm228, %v209, %v217
  %v237 = vsel %vm228, %v219, %v203
  %v238 = vsel %vm228, %v221, %v205
  %v239 = vsel %vm228, %v223, %v207
  %v240 = vsel %vm228, %v225, %v209
  %241 = vrot.lane.b32.xlu0 %v190, 126
  %v242 = vpop.permute.xlu0 %241
  %243 = vrot.lane.b32.xlu0 %v193, 126
  %v244 = vpop.permute.xlu0 %243
  %245 = vrot.lane.b32.xlu0 %v196, 126
  %v246 = vpop.permute.xlu0 %245
  %247 = vrot.lane.b32.xlu0 %v199, 126
  %v248 = vpop.permute.xlu0 %247
  %249 = vrot.lane.b32.xlu0 %v191, 126
  %v250 = vpop.permute.xlu0 %249
  %251 = vrot.lane.b32.xlu0 %v194, 126
  %v252 = vpop.permute.xlu0 %251
  %253 = vrot.lane.b32.xlu0 %v197, 126
  %v254 = vpop.permute.xlu0 %253
  %255 = vrot.lane.b32.xlu0 %v200, 126
  %v256 = vpop.permute.xlu0 %255
  %257 = vrot.lane.b32.xlu0 %v192, 126
  %v258 = vpop.permute.xlu0 %257
  %259 = vrot.lane.b32.xlu0 %v195, 126
  %v260 = vpop.permute.xlu0 %259
  %261 = vrot.lane.b32.xlu0 %v198, 126
  %v262 = vpop.permute.xlu0 %261
  %263 = vrot.lane.b32.xlu0 %v201, 126
  %v264 = vpop.permute.xlu0 %263
  %vm265 = vcmp.lt.s32.totalorder %v227, 126
  %v266 = vsel %vm265, %v250, %v258
  %v267 = vsel %vm265, %v252, %v260
  %v268 = vsel %vm265, %v254, %v262
  %v269 = vsel %vm265, %v256, %v264
  %v270 = vsel %vm265, %v242, %v250
  %v271 = vsel %vm265, %v244, %v252
  %v272 = vsel %vm265, %v246, %v254
  %v273 = vsel %vm265, %v248, %v256
  %v274 = vsel %vm265, %v258, %v242
  %v275 = vsel %vm265, %v260, %v244
  %v276 = vsel %vm265, %v262, %v246
  %v277 = vsel %vm265, %v264, %v248
  %v278 = vld [vmem:[%s5] sm:$0xff]
  %v279 = vld [vmem:[%s5 + $0x8] sm:$0xff]
  %v280 = vld [vmem:[%s5 + $0x10] sm:$0xff]
  %v281 = vld [vmem:[%s5 + $0x18] sm:$0xff]
  %vm282 = vcmask 785408
  %v284 = vsel %vm282, %v278, 0
  %v287 = vsel %vm282, %v279, 0
  %v290 = vsel %vm282, %v280, 0
  %v293 = vsel %vm282, %v281, 0
  %295 = vmatprep.subr.mxu0 0.0
  %296 = vmatpush1.msra.mxu0 0.0
  %297 = vmatprep.subr.mxu0 0.0
  %298 = vmatpush1.msra.mxu0 0.0
  %299 = vmatprep.subr.mxu0 0.0
  %300 = vmatpush1.msra.mxu0 0.0
  %301 = vmatprep.subr.mxu0 0.0
  %302 = vmatpush1.msra.mxu0 0.0
  %303 = vmatprep.subr.mxu0 %v269
  %304 = vmatpush1.msra.mxu0 %v273
  %305 = vmatprep.subr.mxu0 %v268
  %306 = vmatpush1.msra.mxu0 %v272
  %307 = vmatprep.subr.mxu0 %v267
  %308 = vmatpush1.msra.mxu0 %v271
  %309 = vmatprep.subr.mxu0 %v266
  %310 = vmatpush1.msra.mxu0 %v270
  %311 = vmatprep.subr.mxu0 %v200
  %312 = vmatpush1.msra.mxu0 %v199
  %313 = vmatprep.subr.mxu0 %v197
  %314 = vmatpush1.msra.mxu0 %v196
  %315 = vmatprep.subr.mxu0 %v194
  %316 = vmatpush1.msra.mxu0 %v193
  %317 = vmatprep.subr.mxu0 %v191
  %318 = vmatpush1.msra.mxu0 %v190
  %319 = vmatprep.subr.mxu0 %v236
  %320 = vmatpush1.msra.mxu0 %v240
  %321 = vmatprep.subr.mxu0 %v235
  %322 = vmatpush1.msra.mxu0 %v239
  %323 = vmatprep.subr.mxu0 %v234
  %324 = vmatpush1.msra.mxu0 %v238
  %325 = vmatprep.subr.mxu0 %v233
  %326 = vmatpush1.msra.mxu0 %v237
  %327 = vmatprep.subr.mxu0 0.0
  %328 = vmatpush2.msra.mxu0 0.0
  %329 = vmatprep.subr.mxu0 0.0
  %330 = vmatpush2.msra.mxu0 0.0
  %331 = vmatprep.subr.mxu0 0.0
  %332 = vmatpush2.msra.mxu0 0.0
  %333 = vmatprep.subr.mxu0 0.0
  %334 = vmatpush2.msra.mxu0 0.0
  %335 = vmatprep.subr.mxu0 0.0
  %336 = vmatpush2.msra.mxu0 0.0
  %337 = vmatprep.subr.mxu0 0.0
  %338 = vmatpush2.msra.mxu0 0.0
  %339 = vmatprep.subr.mxu0 0.0
  %340 = vmatpush2.msra.mxu0 0.0
  %341 = vmatprep.subr.mxu0 0.0
  %342 = vmatpush2.msra.mxu0 0.0
  %343 = vmatprep.subr.mxu0 0.0
  %344 = vmatpush2.msra.mxu0 0.0
  %345 = vmatprep.subr.mxu0 0.0
  %346 = vmatpush2.msra.mxu0 0.0
  %347 = vmatprep.subr.mxu0 0.0
  %348 = vmatpush2.msra.mxu0 0.0
  %349 = vmatprep.subr.mxu0 0.0
  %350 = vmatpush2.msra.mxu0 0.0
  %351 = vmatprep.subr.mxu0 0.0
  %352 = vmatpush2.msra.mxu0 0.0
  %353 = vmatprep.subr.mxu0 0.0
  %354 = vmatpush2.msra.mxu0 0.0
  %355 = vmatprep.subr.mxu0 0.0
  %356 = vmatpush2.msra.mxu0 0.0
  %357 = vmatprep.subr.mxu0 0.0
  %358 = vmatpush2.msra.mxu0 0.0
  %359 = vmatprep.mubr.f32.mxu0 0.0
  %360 = vmatmul.mubr.f32.gmra.mxu0 %v284
  %v361 = vpop.f32.mrf.mxu0
  %v362 = vadd.f32 0.0, %v361
  %v363 = vpop.f32.mrf.mxu0
  %v364 = vadd.f32 0.0, %v363
  %365 = vmatprep.mubr.f32.mxu0 0.0
  %366 = vmatmul.mubr.f32.gmra.mxu0 %v287
  %v367 = vpop.f32.mrf.mxu0
  %v368 = vadd.f32 0.0, %v367
  %v369 = vpop.f32.mrf.mxu0
  %v370 = vadd.f32 0.0, %v369
  %371 = vmatprep.mubr.f32.mxu0 0.0
  %372 = vmatmul.mubr.f32.gmra.mxu0 %v290
  %v373 = vpop.f32.mrf.mxu0
  %v374 = vadd.f32 0.0, %v373
  %v375 = vpop.f32.mrf.mxu0
  %v376 = vadd.f32 0.0, %v375
  %377 = vmatprep.mubr.f32.mxu0 0.0
  %378 = vmatmul.mubr.f32.gmra.mxu0 %v293
  %v379 = vpop.f32.mrf.mxu0
  %v380 = vadd.f32 0.0, %v379
  %v381 = vpop.f32.mrf.mxu0
  %v382 = vadd.f32 0.0, %v381
  %383 = vdwg.mxu0
  %384 = vmatprep.subr.mxu0 0.0
  %385 = vmatpush1.msra.mxu0 0.0
  %386 = vmatprep.subr.mxu0 0.0
  %387 = vmatpush1.msra.mxu0 0.0
  %388 = vmatprep.subr.mxu0 0.0
  %389 = vmatpush1.msra.mxu0 0.0
  %390 = vmatprep.subr.mxu0 0.0
  %391 = vmatpush1.msra.mxu0 0.0
  %392 = vmatprep.subr.mxu0 0.0
  %393 = vmatpush1.msra.mxu0 %v277
  %394 = vmatprep.subr.mxu0 0.0
  %395 = vmatpush1.msra.mxu0 %v276
  %396 = vmatprep.subr.mxu0 0.0
  %397 = vmatpush1.msra.mxu0 %v275
  %398 = vmatprep.subr.mxu0 0.0
  %399 = vmatpush1.msra.mxu0 %v274
  %400 = vmatprep.subr.mxu0 0.0
  %401 = vmatpush1.msra.mxu0 %v201
  %402 = vmatprep.subr.mxu0 0.0
  %403 = vmatpush1.msra.mxu0 %v198
  %404 = vmatprep.subr.mxu0 0.0
  %405 = vmatpush1.msra.mxu0 %v195
  %406 = vmatprep.subr.mxu0 0.0
  %407 = vmatpush1.msra.mxu0 %v192
  %408 = vmatprep.subr.mxu0 0.0
  %409 = vmatpush1.msra.mxu0 %v232
  %410 = vmatprep.subr.mxu0 0.0
  %411 = vmatpush1.msra.mxu0 %v231
  %412 = vmatprep.subr.mxu0 0.0
  %413 = vmatpush1.msra.mxu0 %v230
  %414 = vmatprep.subr.mxu0 0.0
  %415 = vmatpush1.msra.mxu0 %v229
  %416 = vmatprep.subr.mxu0 0.0
  %417 = vmatpush2.msra.mxu0 0.0
  %418 = vmatprep.subr.mxu0 0.0
  %419 = vmatpush2.msra.mxu0 0.0
  %420 = vmatprep.subr.mxu0 0.0
  %421 = vmatpush2.msra.mxu0 0.0
  %422 = vmatprep.subr.mxu0 0.0
  %423 = vmatpush2.msra.mxu0 0.0
  %424 = vmatprep.subr.mxu0 0.0
  %425 = vmatpush2.msra.mxu0 0.0
  %426 = vmatprep.subr.mxu0 0.0
  %427 = vmatpush2.msra.mxu0 0.0
  %428 = vmatprep.subr.mxu0 0.0
  %429 = vmatpush2.msra.mxu0 0.0
  %430 = vmatprep.subr.mxu0 0.0
  %431 = vmatpush2.msra.mxu0 0.0
  %432 = vmatprep.subr.mxu0 0.0
  %433 = vmatpush2.msra.mxu0 0.0
  %434 = vmatprep.subr.mxu0 0.0
  %435 = vmatpush2.msra.mxu0 0.0
  %436 = vmatprep.subr.mxu0 0.0
  %437 = vmatpush2.msra.mxu0 0.0
  %438 = vmatprep.subr.mxu0 0.0
  %439 = vmatpush2.msra.mxu0 0.0
  %440 = vmatprep.subr.mxu0 0.0
  %441 = vmatpush2.msra.mxu0 0.0
  %442 = vmatprep.subr.mxu0 0.0
  %443 = vmatpush2.msra.mxu0 0.0
  %444 = vmatprep.subr.mxu0 0.0
  %445 = vmatpush2.msra.mxu0 0.0
  %446 = vmatprep.subr.mxu0 0.0
  %447 = vmatpush2.msra.mxu0 0.0
  %448 = vmatprep.mubr.f32.mxu0 0.0
  %449 = vmatmul.mubr.f32.gmra.mxu0 %v284
  %v450 = vpop.f32.mrf.mxu0
  %v451 = vadd.f32 0.0, %v450
  %v452 = vpop.f32.mrf.mxu0
  %453 = vmatprep.mubr.f32.mxu0 0.0
  %454 = vmatmul.mubr.f32.gmra.mxu0 %v287
  %v455 = vpop.f32.mrf.mxu0
  %v456 = vadd.f32 0.0, %v455
  %v457 = vpop.f32.mrf.mxu0
  %458 = vmatprep.mubr.f32.mxu0 0.0
  %459 = vmatmul.mubr.f32.gmra.mxu0 %v290
  %v460 = vpop.f32.mrf.mxu0
  %v461 = vadd.f32 0.0, %v460
  %v462 = vpop.f32.mrf.mxu0
  %463 = vmatprep.mubr.f32.mxu0 0.0
  %464 = vmatmul.mubr.f32.gmra.mxu0 %v293
  %v465 = vpop.f32.mrf.mxu0
  %v466 = vadd.f32 0.0, %v465
  %v467 = vpop.f32.mrf.mxu0
  %468 = vdwg.mxu0
  %v469 = vmul.f32 %v362, %v178
  %v470 = vmul.f32 %v364, %v182
  %v471 = vmul.f32 %v451, %v186
  %v472 = vmul.f32 %v368, %v178
  %v473 = vmul.f32 %v370, %v182
  %v474 = vmul.f32 %v456, %v186
  %v475 = vmul.f32 %v374, %v178
  %v476 = vmul.f32 %v376, %v182
  %v477 = vmul.f32 %v461, %v186
  %v478 = vmul.f32 %v380, %v178
  %v479 = vmul.f32 %v382, %v182
  %v480 = vmul.f32 %v466, %v186
  %481 = vst [vmem:[%s7] sm:$0xff] %v469
  %482 = vst [vmem:[%s7 + $0x8] sm:$0xff] %v470
  %483 = vst [vmem:[%s7 + $0x10] sm:$0xff] %v471
  %484 = vst [vmem:[%s7 + $0x18] sm:$0xff] %v472
  %485 = vst [vmem:[%s7 + $0x20] sm:$0xff] %v473
  %486 = vst [vmem:[%s7 + $0x28] sm:$0xff] %v474
  %487 = vst [vmem:[%s7 + $0x30] sm:$0xff] %v475
  %488 = vst [vmem:[%s7 + $0x38] sm:$0xff] %v476
  %489 = vst [vmem:[%s7 + $0x40] sm:$0xff] %v477
  %490 = vst [vmem:[%s7 + $0x48] sm:$0xff] %v478
  %491 = vst [vmem:[%s7 + $0x50] sm:$0xff] %v479
  %492 = vst [vmem:[%s7 + $0x58] sm:$0xff] %v480
  %p493 = scmp.eq.s32.totalorder 0, 0
  // Predicated region
  $region30: #{res_block_dilated.4} parent=0 // pred_check
    %p494 = pneg %p493
  $region31: #{res_block_dilated.4} parent=0 // pred_check_branch
    %496 = sbr.rel (%p494) target = $region33
  $region32: #{res_block_dilated.4} parent=0 // pred_region
    %vm497 = vcmask 7168
    %498 = vst.msk [vmem:[%s8] sm:$0xff] %vm497, 0.0
    %499 = vst.msk [vmem:[%s8 + $0x8] sm:$0xff] %vm497, 0.0
    %500 = vst.msk [vmem:[%s8 + $0x10] sm:$0xff] %vm497, 0.0
    %501 = vst.msk [vmem:[%s8 + $0x18] sm:$0xff] %vm497, 0.0
    %502 = vst.msk [vmem:[%s9] sm:$0xff] %vm497, 0.0
    %503 = vst.msk [vmem:[%s9 + $0x8] sm:$0xff] %vm497, 0.0
    %504 = vst.msk [vmem:[%s9 + $0x10] sm:$0xff] %vm497, 0.0
    %505 = vst.msk [vmem:[%s9 + $0x18] sm:$0xff] %vm497, 0.0
  $region33: #{res_block_dilated.4} parent=0 // pred_fallthru
    _
  %v506 = vld [vmem:[%s8] sm:$0xff]
  %v507 = vld [vmem:[%s8 + $0x8] sm:$0xff]
  %v508 = vld [vmem:[%s8 + $0x10] sm:$0xff]
  %v509 = vld [vmem:[%s8 + $0x18] sm:$0xff]
  %v510 = vadd.f32 %v469, %v470
  %v511 = vadd.f32 %v510, %v471
  %512 = vadd.xlane.f32.xlu0 %v511
  %v513 = vpop.xlane.xlu0 %512
  %v514 = vadd.f32 %v472, %v473
  %v515 = vadd.f32 %v514, %v474
  %516 = vadd.xlane.f32.xlu0 %v515
  %v517 = vpop.xlane.xlu0 %516
  %v518 = vadd.f32 %v475, %v476
  %v519 = vadd.f32 %v518, %v477
  %520 = vadd.xlane.f32.xlu0 %v519
  %v521 = vpop.xlane.xlu0 %520
  %v522 = vadd.f32 %v478, %v479
  %v523 = vadd.f32 %v522, %v480
  %524 = vadd.xlane.f32.xlu0 %v523
  %v525 = vpop.xlane.xlu0 %524
  %v526 = vadd.f32 %v506, %v513
  %v527 = vadd.f32 %v507, %v517
  %v528 = vadd.f32 %v508, %v521
  %v529 = vadd.f32 %v509, %v525
  %vm530 = vcmask 7168
  %531 = vst.msk [vmem:[%s8] sm:$0xff] %vm530, %v526
  %532 = vst.msk [vmem:[%s8 + $0x8] sm:$0xff] %vm530, %v527
  %533 = vst.msk [vmem:[%s8 + $0x10] sm:$0xff] %vm530, %v528
  %534 = vst.msk [vmem:[%s8 + $0x18] sm:$0xff] %vm530, %v529
  %v535 = vld [vmem:[%s9] sm:$0xff]
  %v536 = vld [vmem:[%s9 + $0x8] sm:$0xff]
  %v537 = vld [vmem:[%s9 + $0x10] sm:$0xff]
  %v538 = vld [vmem:[%s9 + $0x18] sm:$0xff]
  %v539 = vmul.f32 %v469, %v469
  %v540 = vmul.f32 %v470, %v470
  %v541 = vmul.f32 %v471, %v471
  %v542 = vmul.f32 %v472, %v472
  %v543 = vmul.f32 %v473, %v473
  %v544 = vmul.f32 %v474, %v474
  %v545 = vmul.f32 %v475, %v475
  %v546 = vmul.f32 %v476, %v476
  %v547 = vmul.f32 %v477, %v477
  %v548 = vmul.f32 %v478, %v478
  %v549 = vmul.f32 %v479, %v479
  %v550 = vmul.f32 %v480, %v480
  %v551 = vadd.f32 %v539, %v540
  %v552 = vadd.f32 %v551, %v541
  %553 = vadd.xlane.f32.xlu0 %v552
  %v554 = vpop.xlane.xlu0 %553
  %v555 = vadd.f32 %v542, %v543
  %v556 = vadd.f32 %v555, %v544
  %557 = vadd.xlane.f32.xlu0 %v556
  %v558 = vpop.xlane.xlu0 %557
  %v559 = vadd.f32 %v545, %v546
  %v560 = vadd.f32 %v559, %v547
  %561 = vadd.xlane.f32.xlu0 %v560
  %v562 = vpop.xlane.xlu0 %561
  %v563 = vadd.f32 %v548, %v549
  %v564 = vadd.f32 %v563, %v550
  %565 = vadd.xlane.f32.xlu0 %v564
  %v566 = vpop.xlane.xlu0 %565
  %v567 = vadd.f32 %v535, %v554
  %v568 = vadd.f32 %v536, %v558
  %v569 = vadd.f32 %v537, %v562
  %v570 = vadd.f32 %v538, %v566
  %571 = vst.msk [vmem:[%s9] sm:$0xff] %vm530, %v567
  %572 = vst.msk [vmem:[%s9 + $0x8] sm:$0xff] %vm530, %v568
  %573 = vst.msk [vmem:[%s9 + $0x10] sm:$0xff] %vm530, %v569
  %574 = vst.msk [vmem:[%s9 + $0x18] sm:$0xff] %vm530, %v570
  // Predicated region
  $region34: #{res_block_dilated.4} parent=0 // pred_check
    _
  $region35: #{res_block_dilated.4} parent=0 // pred_check_branch
    %576 = sbr.rel (0) target = $region37
  $region36: #{res_block_dilated.4} parent=0 // pred_region
    _
  $region37: #{res_block_dilated.4} parent=0 // pred_fallthru
    _
  // Predicated region
  $region38: #{res_block_dilated.4} parent=0 // pred_check
    _
  $region39: #{res_block_dilated.4} parent=0 // pred_check_branch
    %578 = sbr.rel (0) target = $region41
  $region40: #{res_block_dilated.4} parent=0 // pred_region
    _
  $region41: #{res_block_dilated.4} parent=0 // pred_fallthru
    _
  // Predicated region
  $region42: #{res_block_dilated.4} parent=0 // pred_check
    _
  $region43: #{res_block_dilated.4} parent=0 // pred_check_branch
    %580 = sbr.rel (0) target = $region45
  $region44: #{res_block_dilated.4} parent=0 // pred_region
    _
  $region45: #{res_block_dilated.4} parent=0 // pred_fallthru
    _
  // Predicated region
  $region46: #{res_block_dilated.4} parent=0 // pred_check
    _
  $region47: #{res_block_dilated.4} parent=0 // pred_check_branch
    %582 = sbr.rel (0) target = $region49
  $region48: #{res_block_dilated.4} parent=0 // pred_region
    _
  $region49: #{res_block_dilated.4} parent=0 // pred_fallthru
    _
  // Predicated region
  $region50: #{res_block_dilated.4} parent=0 // pred_check
    _
  $region51: #{res_block_dilated.4} parent=0 // pred_check_branch
    %584 = sbr.rel (0) target = $region53
  $region52: #{res_block_dilated.4} parent=0 // pred_region
    _
  $region53: #{res_block_dilated.4} parent=0 // pred_fallthru
    _
  // Predicated region
  $region54: #{res_block_dilated.4} parent=0 // pred_check
    _
  $region55: #{res_block_dilated.4} parent=0 // pred_check_branch
    %586 = sbr.rel (0) target = $region57
  $region56: #{res_block_dilated.4} parent=0 // pred_region
    _
  $region57: #{res_block_dilated.4} parent=0 // pred_fallthru
    _

</llo_original>
